<compile_context>
chip_gen: v6e
topology: v6e:2x2x1
jax: 0.10.0
libtpu: 0.0.40
codegen_flags: <defaults>
</compile_context>

<pallas_src>
import jax
import jax.numpy as jnp
from jax import lax
from jax.experimental import pallas as pl
from jax.experimental.pallas import tpu as pltpu


def _make_kernel(T, Bpad, H, TBpad):
    """Build the fused kernel for fixed (compile-time) sizes."""
    X_OFF = 0                      # [0, TBpad)        x, time-major, zero-padded cols
    WIH_OFF = X_OFF + TBpad        # [TBpad, +H)       W_ih^T zero-padded to (H, H)
    WHH_OFF = WIH_OFF + H          # [+H, +H)          W_hh^T (H, H)
    H0_OFF = WHH_OFF + H           # [+H, +Bpad)       h0 zero-padded to (Bpad, H)
    B_OFF = H0_OFF + Bpad          # 1 row             b_ih + b_hh
    WLIN_OFF = B_OFF + 1           # 1 row             W_lin

    def kernel(slab_ref, y_ref, hfin_ref):
        """Fused forward pass, single invocation.

        slab_ref: (SLAB_ROWS, H) packed operands (see offsets above)
        y_ref   : (1, TBpad)  lane-dense head output (no b_lin), col = t*Bpad + b
        hfin_ref: (Bpad, H)   final hidden state (rows >= real batch are junk)
        """
        # ---- One-shot (hoisted) loads from the slab: done before the loop. ----
        xall = slab_ref[X_OFF:X_OFF + TBpad, :]          # (TBpad, H)
        wih = slab_ref[WIH_OFF:WIH_OFF + H, :]           # (H, H)  rows >= I are zero
        whh = slab_ref[WHH_OFF:WHH_OFF + H, :]           # (H, H)
        h0 = slab_ref[H0_OFF:H0_OFF + Bpad, :]           # (Bpad, H)
        b = slab_ref[B_OFF:B_OFF + 1, :]                 # (1, H)
        wlin = slab_ref[WLIN_OFF:WLIN_OFF + 1, :]        # (1, H)

        # ---- Hoisted input projection (no time dependence): one MXU call.
        #      Zero-padded x columns x zero-padded W_ih^T rows contribute 0. ----
        xproj = jnp.dot(xall, wih, preferred_element_type=jnp.float32) + b

        # ---- Serial recurrence; T is compile-time -> fully unrolled.
        #      Hidden states stay vreg-resident (no VMEM scratch). ----
        h = h0                                           # (Bpad, H) f32
        hs = []
        for t in range(T):
            pre = xproj[t * Bpad:(t + 1) * Bpad, :] + jnp.dot(
                h, whh, preferred_element_type=jnp.float32)
            h = jnp.tanh(pre)
            hs.append(h)

        hfin_ref[...] = h.astype(hfin_ref.dtype)

        # ---- Fused linear head over all time steps at once, lane-dense:
        #      (1, H) contracted with (TBpad, H) on H -> (1, TBpad). ----
        hseq = jnp.concatenate(hs, axis=0)               # (TBpad, H), tile-aligned
        y = lax.dot_general(wlin, hseq,
                            dimension_numbers=(((1,), (1,)), ((), ())),
                            preferred_element_type=jnp.float32)
        y_ref[...] = y.astype(y_ref.dtype)

    return kernel


def simple_rnn_forward(x, hidden_prev, params):
    """x: (B, T, I) float32, hidden_prev: (1, B, H).

    Returns (out, hidden) matching PyTorch SimpleRNN.forward:
      out    : (1, B*T, 1)   (rows ordered b*T + t, like out.view(-1, H) @ W)
      hidden : (1, B, H)
    """
    B, T, I = x.shape
    H = params["w_hh"].shape[0]
    Bpad = 8                                  # sublane width
    TBpad = T * Bpad                          # 128 -> lane-dense head output

    # ---- Wrapper-side layout plumbing (cheap XLA); kernel stays reshape-free.
    x_tm = jnp.transpose(x, (1, 0, 2))                            # (T, B, I)
    x_tm = jnp.pad(x_tm, ((0, 0), (0, Bpad - B), (0, H - I)))     # (T, Bpad, H)
    x_flat = x_tm.reshape(TBpad, H).astype(jnp.float32)           # row = t*Bpad + b

    wih_pad = jnp.pad(params["w_ih"].T, ((0, H - I), (0, 0)))     # (H, H)
    whh_T = params["w_hh"].T                                      # (H, H)
    h0 = jnp.pad(hidden_prev[0], ((0, Bpad - B), (0, 0)))         # (Bpad, H)
    b = (params["b_ih"] + params["b_hh"]).reshape(1, H)           # fused RNN bias
    wlin = params["w_lin"].reshape(1, H)                          # (1, H)

    rows = TBpad + 2 * H + Bpad + 2
    SLAB_ROWS = ((rows + 7) // 8) * 8
    slab = jnp.concatenate(
        [x_flat, wih_pad, whh_T, h0, b, wlin,
         jnp.zeros((SLAB_ROWS - rows, H), jnp.float32)], axis=0)  # (SLAB_ROWS, H)

    kernel = _make_kernel(T, Bpad, H, TBpad)

    grid_spec = pltpu.PrefetchScalarGridSpec(
        num_scalar_prefetch=0,
        grid=(1,),                                                # single invocation
        in_specs=[pl.BlockSpec((SLAB_ROWS, H), lambda i: (0, 0))],
        out_specs=[
            pl.BlockSpec((1, TBpad), lambda i: (0, 0)),           # lane-dense y
            pl.BlockSpec((Bpad, H), lambda i: (0, 0)),            # final hidden
        ],
        scratch_shapes=[],
    )

    y_row, h_fin = pl.pallas_call(
        kernel,
        grid_spec=grid_spec,
        out_shape=(
            jax.ShapeDtypeStruct((1, TBpad), jnp.float32),
            jax.ShapeDtypeStruct((Bpad, H), jnp.float32),
        ),
        compiler_params=pltpu.CompilerParams(
            dimension_semantics=("arbitrary",)),
    )(slab)

    # Columns ordered t*Bpad + b -> drop padded batch, PyTorch (b, t) flattening,
    # add the linear-head bias here (one scalar add, kept out of the kernel).
    y = (y_row.reshape(T, Bpad)[:, :B].T.reshape(B * T, 1)
         + params["b_lin"].reshape(1, 1))[None]                   # (1, B*T, 1)
    hidden = h_fin[:B][None]                                      # (1, B, H)
    return y, hidden


def reference_forward(x, hidden_prev, params):
    """Pure JAX reference for verification (mirrors the PyTorch module)."""
    B, T, I = x.shape
    H = params["w_hh"].shape[0]
    h = hidden_prev[0]
    outs = []
    for t in range(T):
        h = jnp.tanh(x[:, t, :] @ params["w_ih"].T + params["b_ih"]
                     + h @ params["w_hh"].T + params["b_hh"])
        outs.append(h)
    out = jnp.stack(outs, axis=1)                     # (B, T, H)
    flat = out.reshape(-1, H)
    y = (flat @ params["w_lin"].T + params["b_lin"])[None]
    return y, h[None]


if __name__ == "__main__":
    B, T, I, H, O = 2, 16, 4, 16, 1

    key = jax.random.PRNGKey(0)
    kx, kh, k1, k2, k3, k4, k5, k6 = jax.random.split(key, 8)

    # Deterministic parameter init (RNN params ~ N(0, 0.001), linear small normal).
    params = {
        "w_ih": 0.001 * jax.random.normal(k1, (H, I), jnp.float32),
        "w_hh": 0.001 * jax.random.normal(k2, (H, H), jnp.float32),
        "b_ih": 0.001 * jax.random.normal(k3, (H,), jnp.float32),
        "b_hh": 0.001 * jax.random.normal(k4, (H,), jnp.float32),
        "w_lin": 0.1 * jax.random.normal(k5, (O, H), jnp.float32),
        "b_lin": 0.1 * jax.random.normal(k6, (O,), jnp.float32),
    }

    x = jax.random.normal(kx, (B, T, I), jnp.float32)
    hidden_prev = jax.random.normal(kh, (1, B, H), jnp.float32)

    out, hidden = simple_rnn_forward(x, hidden_prev, params)
    out = jax.block_until_ready(out)
    hidden = jax.block_until_ready(hidden)

    out_ref, hidden_ref = reference_forward(x, hidden_prev, params)
    assert out.shape == (1, B * T, O)
    assert hidden.shape == (1, B, H)
    assert jnp.allclose(out, out_ref, atol=1e-5), "output mismatch"
    assert jnp.allclose(hidden, hidden_ref, atol=1e-5), "hidden mismatch"

    print("KERNEL_OK")
</pallas_src>

<mosaic_0001>
module attributes {stable_mosaic.version = 11 : i64} {
  func.func @kernel(%arg0: i32, %arg1: memref<176x16xf32, #tpu.memory_space<vmem>>, %arg2: memref<1x128xf32, #tpu.memory_space<vmem>>, %arg3: memref<8x16xf32, #tpu.memory_space<vmem>>) attributes {dimension_semantics = [#tpu.dimension_semantics<arbitrary>], iteration_bounds = array<i64: 1>, scalar_prefetch = 0 : i64, scratch_operands = 0 : i64, tpu.core_type = #tpu.core_type<tc>, window_params = [{pipeline_mode = #tpu.pipeline_mode<synchronous>, transform_indices = @transform_0, window_bounds = array<i64: 176, 16>}, {pipeline_mode = #tpu.pipeline_mode<synchronous>, transform_indices = @transform_1, window_bounds = array<i64: 1, 128>}, {pipeline_mode = #tpu.pipeline_mode<synchronous>, transform_indices = @transform_2, window_bounds = array<i64: 8, 16>}]} {
    %c0 = arith.constant 0 : index
    %c0_0 = arith.constant 0 : index
    %0 = vector.load %arg1[%c0, %c0_0] : memref<176x16xf32, #tpu.memory_space<vmem>>, vector<128x16xf32>
    %c128 = arith.constant 128 : index
    %c0_1 = arith.constant 0 : index
    %1 = vector.load %arg1[%c128, %c0_1] : memref<176x16xf32, #tpu.memory_space<vmem>>, vector<16x16xf32>
    %c144 = arith.constant 144 : index
    %c0_2 = arith.constant 0 : index
    %2 = vector.load %arg1[%c144, %c0_2] : memref<176x16xf32, #tpu.memory_space<vmem>>, vector<16x16xf32>
    %c160 = arith.constant 160 : index
    %c0_3 = arith.constant 0 : index
    %3 = vector.load %arg1[%c160, %c0_3] : memref<176x16xf32, #tpu.memory_space<vmem>>, vector<8x16xf32>
    %c168 = arith.constant 168 : index
    %c0_4 = arith.constant 0 : index
    %4 = vector.load %arg1[%c168, %c0_4] : memref<176x16xf32, #tpu.memory_space<vmem>>, vector<1x16xf32>
    %c169 = arith.constant 169 : index
    %c0_5 = arith.constant 0 : index
    %5 = vector.load %arg1[%c169, %c0_5] : memref<176x16xf32, #tpu.memory_space<vmem>>, vector<1x16xf32>
    %cst = arith.constant dense<0.000000e+00> : vector<128x16xf32>
    %6 = tpu.matmul %0, %1, %cst {dimension_numbers = #tpu.dot_dimension_numbers<[1], [0], [0], [1], [0, 0, 1, 1], [], []>} : vector<128x16xf32>, vector<16x16xf32>, vector<128x16xf32> -> vector<128x16xf32>
    %7 = vector.broadcast %4 : vector<1x16xf32> to vector<128x16xf32>
    %8 = arith.addf %6, %7 : vector<128x16xf32>
    %9 = vector.extract_strided_slice %8 {offsets = [0, 0], sizes = [8, 16], strides = [1, 1]} : vector<128x16xf32> to vector<8x16xf32>
    %cst_6 = arith.constant dense<0.000000e+00> : vector<8x16xf32>
    %10 = tpu.matmul %3, %2, %cst_6 {dimension_numbers = #tpu.dot_dimension_numbers<[1], [0], [0], [1], [0, 0, 1, 1], [], []>} : vector<8x16xf32>, vector<16x16xf32>, vector<8x16xf32> -> vector<8x16xf32>
    %11 = arith.addf %9, %10 : vector<8x16xf32>
    %12 = math.tanh %11 : vector<8x16xf32>
    %13 = vector.extract_strided_slice %8 {offsets = [8, 0], sizes = [8, 16], strides = [1, 1]} : vector<128x16xf32> to vector<8x16xf32>
    %cst_7 = arith.constant dense<0.000000e+00> : vector<8x16xf32>
    %14 = tpu.matmul %12, %2, %cst_7 {dimension_numbers = #tpu.dot_dimension_numbers<[1], [0], [0], [1], [0, 0, 1, 1], [], []>} : vector<8x16xf32>, vector<16x16xf32>, vector<8x16xf32> -> vector<8x16xf32>
    %15 = arith.addf %13, %14 : vector<8x16xf32>
    %16 = math.tanh %15 : vector<8x16xf32>
    %17 = vector.extract_strided_slice %8 {offsets = [16, 0], sizes = [8, 16], strides = [1, 1]} : vector<128x16xf32> to vector<8x16xf32>
    %cst_8 = arith.constant dense<0.000000e+00> : vector<8x16xf32>
    %18 = tpu.matmul %16, %2, %cst_8 {dimension_numbers = #tpu.dot_dimension_numbers<[1], [0], [0], [1], [0, 0, 1, 1], [], []>} : vector<8x16xf32>, vector<16x16xf32>, vector<8x16xf32> -> vector<8x16xf32>
    %19 = arith.addf %17, %18 : vector<8x16xf32>
    %20 = math.tanh %19 : vector<8x16xf32>
    %21 = vector.extract_strided_slice %8 {offsets = [24, 0], sizes = [8, 16], strides = [1, 1]} : vector<128x16xf32> to vector<8x16xf32>
    %cst_9 = arith.constant dense<0.000000e+00> : vector<8x16xf32>
    %22 = tpu.matmul %20, %2, %cst_9 {dimension_numbers = #tpu.dot_dimension_numbers<[1], [0], [0], [1], [0, 0, 1, 1], [], []>} : vector<8x16xf32>, vector<16x16xf32>, vector<8x16xf32> -> vector<8x16xf32>
    %23 = arith.addf %21, %22 : vector<8x16xf32>
    %24 = math.tanh %23 : vector<8x16xf32>
    %25 = vector.extract_strided_slice %8 {offsets = [32, 0], sizes = [8, 16], strides = [1, 1]} : vector<128x16xf32> to vector<8x16xf32>
    %cst_10 = arith.constant dense<0.000000e+00> : vector<8x16xf32>
    %26 = tpu.matmul %24, %2, %cst_10 {dimension_numbers = #tpu.dot_dimension_numbers<[1], [0], [0], [1], [0, 0, 1, 1], [], []>} : vector<8x16xf32>, vector<16x16xf32>, vector<8x16xf32> -> vector<8x16xf32>
    %27 = arith.addf %25, %26 : vector<8x16xf32>
    %28 = math.tanh %27 : vector<8x16xf32>
    %29 = vector.extract_strided_slice %8 {offsets = [40, 0], sizes = [8, 16], strides = [1, 1]} : vector<128x16xf32> to vector<8x16xf32>
    %cst_11 = arith.constant dense<0.000000e+00> : vector<8x16xf32>
    %30 = tpu.matmul %28, %2, %cst_11 {dimension_numbers = #tpu.dot_dimension_numbers<[1], [0], [0], [1], [0, 0, 1, 1], [], []>} : vector<8x16xf32>, vector<16x16xf32>, vector<8x16xf32> -> vector<8x16xf32>
    %31 = arith.addf %29, %30 : vector<8x16xf32>
    %32 = math.tanh %31 : vector<8x16xf32>
    %33 = vector.extract_strided_slice %8 {offsets = [48, 0], sizes = [8, 16], strides = [1, 1]} : vector<128x16xf32> to vector<8x16xf32>
    %cst_12 = arith.constant dense<0.000000e+00> : vector<8x16xf32>
    %34 = tpu.matmul %32, %2, %cst_12 {dimension_numbers = #tpu.dot_dimension_numbers<[1], [0], [0], [1], [0, 0, 1, 1], [], []>} : vector<8x16xf32>, vector<16x16xf32>, vector<8x16xf32> -> vector<8x16xf32>
    %35 = arith.addf %33, %34 : vector<8x16xf32>
    %36 = math.tanh %35 : vector<8x16xf32>
    %37 = vector.extract_strided_slice %8 {offsets = [56, 0], sizes = [8, 16], strides = [1, 1]} : vector<128x16xf32> to vector<8x16xf32>
    %cst_13 = arith.constant dense<0.000000e+00> : vector<8x16xf32>
    %38 = tpu.matmul %36, %2, %cst_13 {dimension_numbers = #tpu.dot_dimension_numbers<[1], [0], [0], [1], [0, 0, 1, 1], [], []>} : vector<8x16xf32>, vector<16x16xf32>, vector<8x16xf32> -> vector<8x16xf32>
    %39 = arith.addf %37, %38 : vector<8x16xf32>
    %40 = math.tanh %39 : vector<8x16xf32>
    %41 = vector.extract_strided_slice %8 {offsets = [64, 0], sizes = [8, 16], strides = [1, 1]} : vector<128x16xf32> to vector<8x16xf32>
    %cst_14 = arith.constant dense<0.000000e+00> : vector<8x16xf32>
    %42 = tpu.matmul %40, %2, %cst_14 {dimension_numbers = #tpu.dot_dimension_numbers<[1], [0], [0], [1], [0, 0, 1, 1], [], []>} : vector<8x16xf32>, vector<16x16xf32>, vector<8x16xf32> -> vector<8x16xf32>
    %43 = arith.addf %41, %42 : vector<8x16xf32>
    %44 = math.tanh %43 : vector<8x16xf32>
    %45 = vector.extract_strided_slice %8 {offsets = [72, 0], sizes = [8, 16], strides = [1, 1]} : vector<128x16xf32> to vector<8x16xf32>
    %cst_15 = arith.constant dense<0.000000e+00> : vector<8x16xf32>
    %46 = tpu.matmul %44, %2, %cst_15 {dimension_numbers = #tpu.dot_dimension_numbers<[1], [0], [0], [1], [0, 0, 1, 1], [], []>} : vector<8x16xf32>, vector<16x16xf32>, vector<8x16xf32> -> vector<8x16xf32>
    %47 = arith.addf %45, %46 : vector<8x16xf32>
    %48 = math.tanh %47 : vector<8x16xf32>
    %49 = vector.extract_strided_slice %8 {offsets = [80, 0], sizes = [8, 16], strides = [1, 1]} : vector<128x16xf32> to vector<8x16xf32>
    %cst_16 = arith.constant dense<0.000000e+00> : vector<8x16xf32>
    %50 = tpu.matmul %48, %2, %cst_16 {dimension_numbers = #tpu.dot_dimension_numbers<[1], [0], [0], [1], [0, 0, 1, 1], [], []>} : vector<8x16xf32>, vector<16x16xf32>, vector<8x16xf32> -> vector<8x16xf32>
    %51 = arith.addf %49, %50 : vector<8x16xf32>
    %52 = math.tanh %51 : vector<8x16xf32>
    %53 = vector.extract_strided_slice %8 {offsets = [88, 0], sizes = [8, 16], strides = [1, 1]} : vector<128x16xf32> to vector<8x16xf32>
    %cst_17 = arith.constant dense<0.000000e+00> : vector<8x16xf32>
    %54 = tpu.matmul %52, %2, %cst_17 {dimension_numbers = #tpu.dot_dimension_numbers<[1], [0], [0], [1], [0, 0, 1, 1], [], []>} : vector<8x16xf32>, vector<16x16xf32>, vector<8x16xf32> -> vector<8x16xf32>
    %55 = arith.addf %53, %54 : vector<8x16xf32>
    %56 = math.tanh %55 : vector<8x16xf32>
    %57 = vector.extract_strided_slice %8 {offsets = [96, 0], sizes = [8, 16], strides = [1, 1]} : vector<128x16xf32> to vector<8x16xf32>
    %cst_18 = arith.constant dense<0.000000e+00> : vector<8x16xf32>
    %58 = tpu.matmul %56, %2, %cst_18 {dimension_numbers = #tpu.dot_dimension_numbers<[1], [0], [0], [1], [0, 0, 1, 1], [], []>} : vector<8x16xf32>, vector<16x16xf32>, vector<8x16xf32> -> vector<8x16xf32>
    %59 = arith.addf %57, %58 : vector<8x16xf32>
    %60 = math.tanh %59 : vector<8x16xf32>
    %61 = vector.extract_strided_slice %8 {offsets = [104, 0], sizes = [8, 16], strides = [1, 1]} : vector<128x16xf32> to vector<8x16xf32>
    %cst_19 = arith.constant dense<0.000000e+00> : vector<8x16xf32>
    %62 = tpu.matmul %60, %2, %cst_19 {dimension_numbers = #tpu.dot_dimension_numbers<[1], [0], [0], [1], [0, 0, 1, 1], [], []>} : vector<8x16xf32>, vector<16x16xf32>, vector<8x16xf32> -> vector<8x16xf32>
    %63 = arith.addf %61, %62 : vector<8x16xf32>
    %64 = math.tanh %63 : vector<8x16xf32>
    %65 = vector.extract_strided_slice %8 {offsets = [112, 0], sizes = [8, 16], strides = [1, 1]} : vector<128x16xf32> to vector<8x16xf32>
    %cst_20 = arith.constant dense<0.000000e+00> : vector<8x16xf32>
    %66 = tpu.matmul %64, %2, %cst_20 {dimension_numbers = #tpu.dot_dimension_numbers<[1], [0], [0], [1], [0, 0, 1, 1], [], []>} : vector<8x16xf32>, vector<16x16xf32>, vector<8x16xf32> -> vector<8x16xf32>
    %67 = arith.addf %65, %66 : vector<8x16xf32>
    %68 = math.tanh %67 : vector<8x16xf32>
    %69 = vector.extract_strided_slice %8 {offsets = [120, 0], sizes = [8, 16], strides = [1, 1]} : vector<128x16xf32> to vector<8x16xf32>
    %cst_21 = arith.constant dense<0.000000e+00> : vector<8x16xf32>
    %70 = tpu.matmul %68, %2, %cst_21 {dimension_numbers = #tpu.dot_dimension_numbers<[1], [0], [0], [1], [0, 0, 1, 1], [], []>} : vector<8x16xf32>, vector<16x16xf32>, vector<8x16xf32> -> vector<8x16xf32>
    %71 = arith.addf %69, %70 : vector<8x16xf32>
    %72 = math.tanh %71 : vector<8x16xf32>
    %c0_22 = arith.constant 0 : index
    %c0_23 = arith.constant 0 : index
    %73 = vector.load %arg3[%c0_22, %c0_23] : memref<8x16xf32, #tpu.memory_space<vmem>>, vector<8x16xf32>
    tpu.vector_store %arg3[%c0_22, %c0_23], %72 {strides = array<i32>} : memref<8x16xf32, #tpu.memory_space<vmem>>, vector<8x16xf32>,
    %74 = tpu.concatenate %12, %16, %20, %24, %28, %32, %36, %40, %44, %48, %52, %56, %60, %64, %68, %72 in 0 : vector<8x16xf32>, vector<8x16xf32>, vector<8x16xf32>, vector<8x16xf32>, vector<8x16xf32>, vector<8x16xf32>, vector<8x16xf32>, vector<8x16xf32>, vector<8x16xf32>, vector<8x16xf32>, vector<8x16xf32>, vector<8x16xf32>, vector<8x16xf32>, vector<8x16xf32>, vector<8x16xf32>, vector<8x16xf32> -> vector<128x16xf32>
    %cst_24 = arith.constant dense<0.000000e+00> : vector<1x128xf32>
    %75 = tpu.matmul %5, %74, %cst_24 {dimension_numbers = #tpu.dot_dimension_numbers<[1], [1], [0], [0], [0, 0, 1, 0], [], []>} : vector<1x16xf32>, vector<128x16xf32>, vector<1x128xf32> -> vector<1x128xf32>
    %c0_25 = arith.constant 0 : index
    %c0_26 = arith.constant 0 : index
    %76 = vector.load %arg2[%c0_25, %c0_26] : memref<1x128xf32, #tpu.memory_space<vmem>>, vector<1x128xf32>
    tpu.vector_store %arg2[%c0_25, %c0_26], %75 {strides = array<i32>} : memref<1x128xf32, #tpu.memory_space<vmem>>, vector<1x128xf32>,
    return
  }
  func.func @transform_0(%arg0: i32) -> (i32, i32) {
    %c0_i32 = arith.constant 0 : i32
    %c0_i32_0 = arith.constant 0 : i32
    %c0_i32_1 = arith.constant 0 : i32
    return %c0_i32, %c0_i32_0 : i32, i32
  }
  func.func @transform_1(%arg0: i32) -> (i32, i32) {
    %c0_i32 = arith.constant 0 : i32
    %c0_i32_0 = arith.constant 0 : i32
    %c0_i32_1 = arith.constant 0 : i32
    return %c0_i32, %c0_i32_0 : i32, i32
  }
  func.func @transform_2(%arg0: i32) -> (i32, i32) {
    %c0_i32 = arith.constant 0 : i32
    %c0_i32_0 = arith.constant 0 : i32
    %c0_i32_1 = arith.constant 0 : i32
    return %c0_i32, %c0_i32_0 : i32, i32
  }
}

</mosaic_0001>

<llo_original>
// kernel: tpu_custom_call.1
$region0: #{tpu_custom_call.1}
  #allocation0 [shape = 'u32[]', space=smem, size = 0x4, offset = 0x4, fixed_abs, tag = 'smem constant byte address 0x4 - core index']
  #allocation1 [shape = 'u32[144,128]{1,0:T(1,128)}', space=vmem, size = 0x12000, scoped, tag = 'internal scratch']
  %s0 = inlined_call_operand.vmem [shape: f32[176,16], index: 0, kind: input, shape index: {}]
  %s1 = inlined_call_operand.hbm [shape: f32[1,128], index: 1, kind: output, shape index: {0}]
  %s2 = inlined_call_operand.hbm [shape: f32[8,16], index: 2, kind: output, shape index: {1}]
  %3 = xla_tuple %s1, %s2
  %s4 = sld [smem:[#allocation0]]
  $region22: #{tpu_custom_call.1} parent=0
    _
  %s6 = ssub.s32 1, %s4
  %s7 = scalar_select 0, %s6, %s4
  $region1: #{tpu_custom_call.1} parent=0
    #allocation2 [shape = 'u8[512]{0}', space=vmem, size = 0x400, scoped, tag = 'output window, operand 0, single buffered']
    #allocation3 [shape = 's32[1]{0}', space=sflag, size = 0x4, scoped, tag = 'scoped memory for tpu_custom_call.1']
    #allocation4 [shape = 'u8[4096]{0}', space=vmem, size = 0x1000, scoped, tag = 'output window, operand 1, single buffered']
    #allocation5 [shape = 's32[1]{0}', space=sflag, size = 0x4, scoped, tag = 'scoped memory for tpu_custom_call.1']
    %8 = vsyncpa [#allocation3], 0
    %9 = vsyncpa [#allocation5], 0
    // Predicated region
    $region2: #{tpu_custom_call.1} parent=1 // pred_check
      _
    $region3: #{tpu_custom_call.1} parent=1 // pred_check_branch
      %11 = sbr.rel (0) target = $region5
    $region4: #{tpu_custom_call.1} parent=1 // pred_region
      _
    $region5: #{tpu_custom_call.1} parent=1 // pred_fallthru
      _
    %v12 = vld [vmem:[%s0] sm:$0xff]
    %v13 = vld [vmem:[%s0 + $0x8] sm:$0xff]
    %v14 = vld [vmem:[%s0 + $0x10] sm:$0xff]
    %v15 = vld [vmem:[%s0 + $0x18] sm:$0xff]
    %v16 = vld [vmem:[%s0 + $0x20] sm:$0xff]
    %v17 = vld [vmem:[%s0 + $0x28] sm:$0xff]
    %v18 = vld [vmem:[%s0 + $0x30] sm:$0xff]
    %v19 = vld [vmem:[%s0 + $0x38] sm:$0xff]
    %v20 = vld [vmem:[%s0 + $0x40] sm:$0xff]
    %v21 = vld [vmem:[%s0 + $0x48] sm:$0xff]
    %v22 = vld [vmem:[%s0 + $0x50] sm:$0xff]
    %v23 = vld [vmem:[%s0 + $0x58] sm:$0xff]
    %v24 = vld [vmem:[%s0 + $0x60] sm:$0xff]
    %v25 = vld [vmem:[%s0 + $0x68] sm:$0xff]
    %v26 = vld [vmem:[%s0 + $0x70] sm:$0xff]
    %v27 = vld [vmem:[%s0 + $0x78] sm:$0xff]
    %v28 = vld [vmem:[%s0 + $0x80] sm:$0xff]
    %v29 = vld [vmem:[%s0 + $0x88] sm:$0xff]
    %v30 = vld [vmem:[%s0 + $0x90] sm:$0xff]
    %v31 = vld [vmem:[%s0 + $0x98] sm:$0xff]
    %v32 = vld [vmem:[%s0 + $0xa0] sm:$0xff]
    %v33 = vld [vmem:[%s0 + $0xa8] sm:$0x1]
    %v34 = vld [vmem:[%s0 + $0xa9] sm:$0x1]
    %v35 = vlaneseq
    %v36 = vshrl.u32 %v35, 7
    %v37 = vsub.s32 0, %v36
    %v38 = vrot.slane %v33, %v37
    %vm39 = vcmask 130048
    %v41 = vsel %vm39, %v12, 0
    %v44 = vsel %vm39, %v13, 0
    %v47 = vsel %vm39, %v14, 0
    %v50 = vsel %vm39, %v15, 0
    %v53 = vsel %vm39, %v16, 0
    %v56 = vsel %vm39, %v17, 0
    %v59 = vsel %vm39, %v18, 0
    %v62 = vsel %vm39, %v19, 0
    %v65 = vsel %vm39, %v20, 0
    %v68 = vsel %vm39, %v21, 0
    %v71 = vsel %vm39, %v22, 0
    %v74 = vsel %vm39, %v23, 0
    %v77 = vsel %vm39, %v24, 0
    %v80 = vsel %vm39, %v25, 0
    %v83 = vsel %vm39, %v26, 0
    %v86 = vsel %vm39, %v27, 0
    %88 = vmatprep.subr.mxu0 0.0
    %89 = vmatpush1.msra.mxu0 0.0
    %90 = vmatprep.subr.mxu0 0.0
    %91 = vmatpush1.msra.mxu0 0.0
    %92 = vmatprep.subr.mxu0 0.0
    %93 = vmatpush1.msra.mxu0 0.0
    %94 = vmatprep.subr.mxu0 0.0
    %95 = vmatpush1.msra.mxu0 0.0
    %96 = vmatprep.subr.mxu0 0.0
    %97 = vmatpush1.msra.mxu0 0.0
    %98 = vmatprep.subr.mxu0 0.0
    %99 = vmatpush1.msra.mxu0 0.0
    %100 = vmatprep.subr.mxu0 0.0
    %101 = vmatpush1.msra.mxu0 0.0
    %102 = vmatprep.subr.mxu0 0.0
    %103 = vmatpush1.msra.mxu0 0.0
    %104 = vmatprep.subr.mxu0 0.0
    %105 = vmatpush1.msra.mxu0 0.0
    %106 = vmatprep.subr.mxu0 0.0
    %107 = vmatpush1.msra.mxu0 0.0
    %108 = vmatprep.subr.mxu0 0.0
    %109 = vmatpush1.msra.mxu0 0.0
    %110 = vmatprep.subr.mxu0 0.0
    %111 = vmatpush1.msra.mxu0 0.0
    %112 = vmatprep.subr.mxu0 0.0
    %113 = vmatpush1.msra.mxu0 0.0
    %114 = vmatprep.subr.mxu0 0.0
    %115 = vmatpush1.msra.mxu0 0.0
    %116 = vmatprep.subr.mxu0 0.0
    %117 = vmatpush1.msra.mxu0 %v29
    %118 = vmatprep.subr.mxu0 0.0
    %119 = vmatpush1.msra.mxu0 %v28
    %120 = vmatprep.subr.mxu0 0.0
    %121 = vmatpush2.msra.mxu0 0.0
    %122 = vmatprep.subr.mxu0 0.0
    %123 = vmatpush2.msra.mxu0 0.0
    %124 = vmatprep.subr.mxu0 0.0
    %125 = vmatpush2.msra.mxu0 0.0
    %126 = vmatprep.subr.mxu0 0.0
    %127 = vmatpush2.msra.mxu0 0.0
    %128 = vmatprep.subr.mxu0 0.0
    %129 = vmatpush2.msra.mxu0 0.0
    %130 = vmatprep.subr.mxu0 0.0
    %131 = vmatpush2.msra.mxu0 0.0
    %132 = vmatprep.subr.mxu0 0.0
    %133 = vmatpush2.msra.mxu0 0.0
    %134 = vmatprep.subr.mxu0 0.0
    %135 = vmatpush2.msra.mxu0 0.0
    %136 = vmatprep.subr.mxu0 0.0
    %137 = vmatpush2.msra.mxu0 0.0
    %138 = vmatprep.subr.mxu0 0.0
    %139 = vmatpush2.msra.mxu0 0.0
    %140 = vmatprep.subr.mxu0 0.0
    %141 = vmatpush2.msra.mxu0 0.0
    %142 = vmatprep.subr.mxu0 0.0
    %143 = vmatpush2.msra.mxu0 0.0
    %144 = vmatprep.subr.mxu0 0.0
    %145 = vmatpush2.msra.mxu0 0.0
    %146 = vmatprep.subr.mxu0 0.0
    %147 = vmatpush2.msra.mxu0 0.0
    %148 = vmatprep.subr.mxu0 0.0
    %149 = vmatpush2.msra.mxu0 0.0
    %150 = vmatprep.subr.mxu0 0.0
    %151 = vmatpush2.msra.mxu0 0.0
    %152 = vmatprep.mubr.f32.mxu0 0.0
    %153 = vmatmul.mubr.f32.gmra.mxu0 %v41
    %v154 = vpop.f32.mrf.mxu0
    %v155 = vadd.f32 %v38, %v154
    %v156 = vpop.f32.mrf.mxu0
    %157 = vmatprep.mubr.f32.mxu0 0.0
    %158 = vmatmul.mubr.f32.gmra.mxu0 %v44
    %v159 = vpop.f32.mrf.mxu0
    %v160 = vadd.f32 %v38, %v159
    %v161 = vpop.f32.mrf.mxu0
    %162 = vmatprep.mubr.f32.mxu0 0.0
    %163 = vmatmul.mubr.f32.gmra.mxu0 %v47
    %v164 = vpop.f32.mrf.mxu0
    %v165 = vadd.f32 %v38, %v164
    %v166 = vpop.f32.mrf.mxu0
    %167 = vmatprep.mubr.f32.mxu0 0.0
    %168 = vmatmul.mubr.f32.gmra.mxu0 %v50
    %v169 = vpop.f32.mrf.mxu0
    %v170 = vadd.f32 %v38, %v169
    %v171 = vpop.f32.mrf.mxu0
    %172 = vmatprep.mubr.f32.mxu0 0.0
    %173 = vmatmul.mubr.f32.gmra.mxu0 %v53
    %v174 = vpop.f32.mrf.mxu0
    %v175 = vadd.f32 %v38, %v174
    %v176 = vpop.f32.mrf.mxu0
    %177 = vmatprep.mubr.f32.mxu0 0.0
    %178 = vmatmul.mubr.f32.gmra.mxu0 %v56
    %v179 = vpop.f32.mrf.mxu0
    %v180 = vadd.f32 %v38, %v179
    %v181 = vpop.f32.mrf.mxu0
    %182 = vmatprep.mubr.f32.mxu0 0.0
    %183 = vmatmul.mubr.f32.gmra.mxu0 %v59
    %v184 = vpop.f32.mrf.mxu0
    %v185 = vadd.f32 %v38, %v184
    %v186 = vpop.f32.mrf.mxu0
    %187 = vmatprep.mubr.f32.mxu0 0.0
    %188 = vmatmul.mubr.f32.gmra.mxu0 %v62
    %v189 = vpop.f32.mrf.mxu0
    %v190 = vadd.f32 %v38, %v189
    %v191 = vpop.f32.mrf.mxu0
    %192 = vmatprep.mubr.f32.mxu0 0.0
    %193 = vmatmul.mubr.f32.gmra.mxu0 %v65
    %v194 = vpop.f32.mrf.mxu0
    %v195 = vadd.f32 %v38, %v194
    %v196 = vpop.f32.mrf.mxu0
    %197 = vmatprep.mubr.f32.mxu0 0.0
    %198 = vmatmul.mubr.f32.gmra.mxu0 %v68
    %v199 = vpop.f32.mrf.mxu0
    %v200 = vadd.f32 %v38, %v199
    %v201 = vpop.f32.mrf.mxu0
    %202 = vmatprep.mubr.f32.mxu0 0.0
    %203 = vmatmul.mubr.f32.gmra.mxu0 %v71
    %v204 = vpop.f32.mrf.mxu0
    %v205 = vadd.f32 %v38, %v204
    %v206 = vpop.f32.mrf.mxu0
    %207 = vmatprep.mubr.f32.mxu0 0.0
    %208 = vmatmul.mubr.f32.gmra.mxu0 %v74
    %v209 = vpop.f32.mrf.mxu0
    %v210 = vadd.f32 %v38, %v209
    %v211 = vpop.f32.mrf.mxu0
    %212 = vmatprep.mubr.f32.mxu0 0.0
    %213 = vmatmul.mubr.f32.gmra.mxu0 %v77
    %v214 = vpop.f32.mrf.mxu0
    %v215 = vadd.f32 %v38, %v214
    %v216 = vpop.f32.mrf.mxu0
    %217 = vmatprep.mubr.f32.mxu0 0.0
    %218 = vmatmul.mubr.f32.gmra.mxu0 %v80
    %v219 = vpop.f32.mrf.mxu0
    %v220 = vadd.f32 %v38, %v219
    %v221 = vpop.f32.mrf.mxu0
    %222 = vmatprep.mubr.f32.mxu0 0.0
    %223 = vmatmul.mubr.f32.gmra.mxu0 %v83
    %v224 = vpop.f32.mrf.mxu0
    %v225 = vadd.f32 %v38, %v224
    %v226 = vpop.f32.mrf.mxu0
    %227 = vmatprep.mubr.f32.mxu0 0.0
    %228 = vmatmul.mubr.f32.gmra.mxu0 %v86
    %v229 = vpop.f32.mrf.mxu0
    %v230 = vadd.f32 %v38, %v229
    %v231 = vpop.f32.mrf.mxu0
    %232 = vdwg.mxu0
    %v234 = vsel %vm39, %v32, 0
    %236 = vmatprep.subr.mxu0 0.0
    %237 = vmatpush1.msra.mxu0 0.0
    %238 = vmatprep.subr.mxu0 0.0
    %239 = vmatpush1.msra.mxu0 0.0
    %240 = vmatprep.subr.mxu0 0.0
    %241 = vmatpush1.msra.mxu0 0.0
    %242 = vmatprep.subr.mxu0 0.0
    %243 = vmatpush1.msra.mxu0 0.0
    %244 = vmatprep.subr.mxu0 0.0
    %245 = vmatpush1.msra.mxu0 0.0
    %246 = vmatprep.subr.mxu0 0.0
    %247 = vmatpush1.msra.mxu0 0.0
    %248 = vmatprep.subr.mxu0 0.0
    %249 = vmatpush1.msra.mxu0 0.0
    %250 = vmatprep.subr.mxu0 0.0
    %251 = vmatpush1.msra.mxu0 0.0
    %252 = vmatprep.subr.mxu0 0.0
    %253 = vmatpush1.msra.mxu0 0.0
    %254 = vmatprep.subr.mxu0 0.0
    %255 = vmatpush1.msra.mxu0 0.0
    %256 = vmatprep.subr.mxu0 0.0
    %257 = vmatpush1.msra.mxu0 0.0
    %258 = vmatprep.subr.mxu0 0.0
    %259 = vmatpush1.msra.mxu0 0.0
    %260 = vmatprep.subr.mxu0 0.0
    %261 = vmatpush1.msra.mxu0 0.0
    %262 = vmatprep.subr.mxu0 0.0
    %263 = vmatpush1.msra.mxu0 0.0
    %264 = vmatprep.subr.mxu0 0.0
    %265 = vmatpush1.msra.mxu0 %v31
    %266 = vmatprep.subr.mxu0 0.0
    %267 = vmatpush1.msra.mxu0 %v30
    %268 = vmatprep.subr.mxu0 0.0
    %269 = vmatpush2.msra.mxu0 0.0
    %270 = vmatprep.subr.mxu0 0.0
    %271 = vmatpush2.msra.mxu0 0.0
    %272 = vmatprep.subr.mxu0 0.0
    %273 = vmatpush2.msra.mxu0 0.0
    %274 = vmatprep.subr.mxu0 0.0
    %275 = vmatpush2.msra.mxu0 0.0
    %276 = vmatprep.subr.mxu0 0.0
    %277 = vmatpush2.msra.mxu0 0.0
    %278 = vmatprep.subr.mxu0 0.0
    %279 = vmatpush2.msra.mxu0 0.0
    %280 = vmatprep.subr.mxu0 0.0
    %281 = vmatpush2.msra.mxu0 0.0
    %282 = vmatprep.subr.mxu0 0.0
    %283 = vmatpush2.msra.mxu0 0.0
    %284 = vmatprep.subr.mxu0 0.0
    %285 = vmatpush2.msra.mxu0 0.0
    %286 = vmatprep.subr.mxu0 0.0
    %287 = vmatpush2.msra.mxu0 0.0
    %288 = vmatprep.subr.mxu0 0.0
    %289 = vmatpush2.msra.mxu0 0.0
    %290 = vmatprep.subr.mxu0 0.0
    %291 = vmatpush2.msra.mxu0 0.0
    %292 = vmatprep.subr.mxu0 0.0
    %293 = vmatpush2.msra.mxu0 0.0
    %294 = vmatprep.subr.mxu0 0.0
    %295 = vmatpush2.msra.mxu0 0.0
    %296 = vmatprep.subr.mxu0 0.0
    %297 = vmatpush2.msra.mxu0 0.0
    %298 = vmatprep.subr.mxu0 0.0
    %299 = vmatpush2.msra.mxu0 0.0
    %300 = vmatprep.mubr.f32.mxu0 0.0
    %301 = vmatmul.mubr.f32.gmra.mxu0 %v234
    %v302 = vpop.f32.mrf.mxu0
    %v303 = vadd.f32 0.0, %v302
    %v304 = vpop.f32.mrf.mxu0
    %305 = vdwg.mxu0
    %v306 = vadd.f32 %v155, %v303
    %v307 = vtanh.pop %v306
    %v309 = vsel %vm39, %v307, 0
    %311 = vmatprep.subr.mxu0 0.0
    %312 = vmatpush1.msra.mxu0 0.0
    %313 = vmatprep.subr.mxu0 0.0
    %314 = vmatpush1.msra.mxu0 0.0
    %315 = vmatprep.subr.mxu0 0.0
    %316 = vmatpush1.msra.mxu0 0.0
    %317 = vmatprep.subr.mxu0 0.0
    %318 = vmatpush1.msra.mxu0 0.0
    %319 = vmatprep.subr.mxu0 0.0
    %320 = vmatpush1.msra.mxu0 0.0
    %321 = vmatprep.subr.mxu0 0.0
    %322 = vmatpush1.msra.mxu0 0.0
    %323 = vmatprep.subr.mxu0 0.0
    %324 = vmatpush1.msra.mxu0 0.0
    %325 = vmatprep.subr.mxu0 0.0
    %326 = vmatpush1.msra.mxu0 0.0
    %327 = vmatprep.subr.mxu0 0.0
    %328 = vmatpush1.msra.mxu0 0.0
    %329 = vmatprep.subr.mxu0 0.0
    %330 = vmatpush1.msra.mxu0 0.0
    %331 = vmatprep.subr.mxu0 0.0
    %332 = vmatpush1.msra.mxu0 0.0
    %333 = vmatprep.subr.mxu0 0.0
    %334 = vmatpush1.msra.mxu0 0.0
    %335 = vmatprep.subr.mxu0 0.0
    %336 = vmatpush1.msra.mxu0 0.0
    %337 = vmatprep.subr.mxu0 0.0
    %338 = vmatpush1.msra.mxu0 0.0
    %339 = vmatprep.subr.mxu0 0.0
    %340 = vmatpush1.msra.mxu0 %v31
    %341 = vmatprep.subr.mxu0 0.0
    %342 = vmatpush1.msra.mxu0 %v30
    %343 = vmatprep.subr.mxu0 0.0
    %344 = vmatpush2.msra.mxu0 0.0
    %345 = vmatprep.subr.mxu0 0.0
    %346 = vmatpush2.msra.mxu0 0.0
    %347 = vmatprep.subr.mxu0 0.0
    %348 = vmatpush2.msra.mxu0 0.0
    %349 = vmatprep.subr.mxu0 0.0
    %350 = vmatpush2.msra.mxu0 0.0
    %351 = vmatprep.subr.mxu0 0.0
    %352 = vmatpush2.msra.mxu0 0.0
    %353 = vmatprep.subr.mxu0 0.0
    %354 = vmatpush2.msra.mxu0 0.0
    %355 = vmatprep.subr.mxu0 0.0
    %356 = vmatpush2.msra.mxu0 0.0
    %357 = vmatprep.subr.mxu0 0.0
    %358 = vmatpush2.msra.mxu0 0.0
    %359 = vmatprep.subr.mxu0 0.0
    %360 = vmatpush2.msra.mxu0 0.0
    %361 = vmatprep.subr.mxu0 0.0
    %362 = vmatpush2.msra.mxu0 0.0
    %363 = vmatprep.subr.mxu0 0.0
    %364 = vmatpush2.msra.mxu0 0.0
    %365 = vmatprep.subr.mxu0 0.0
    %366 = vmatpush2.msra.mxu0 0.0
    %367 = vmatprep.subr.mxu0 0.0
    %368 = vmatpush2.msra.mxu0 0.0
    %369 = vmatprep.subr.mxu0 0.0
    %370 = vmatpush2.msra.mxu0 0.0
    %371 = vmatprep.subr.mxu0 0.0
    %372 = vmatpush2.msra.mxu0 0.0
    %373 = vmatprep.subr.mxu0 0.0
    %374 = vmatpush2.msra.mxu0 0.0
    %375 = vmatprep.mubr.f32.mxu0 0.0
    %376 = vmatmul.mubr.f32.gmra.mxu0 %v309
    %v377 = vpop.f32.mrf.mxu0
    %v378 = vadd.f32 0.0, %v377
    %v379 = vpop.f32.mrf.mxu0
    %380 = vdwg.mxu0
    %v381 = vadd.f32 %v160, %v378
    %v382 = vtanh.pop %v381
    %v384 = vsel %vm39, %v382, 0
    %386 = vmatprep.subr.mxu0 0.0
    %387 = vmatpush1.msra.mxu0 0.0
    %388 = vmatprep.subr.mxu0 0.0
    %389 = vmatpush1.msra.mxu0 0.0
    %390 = vmatprep.subr.mxu0 0.0
    %391 = vmatpush1.msra.mxu0 0.0
    %392 = vmatprep.subr.mxu0 0.0
    %393 = vmatpush1.msra.mxu0 0.0
    %394 = vmatprep.subr.mxu0 0.0
    %395 = vmatpush1.msra.mxu0 0.0
    %396 = vmatprep.subr.mxu0 0.0
    %397 = vmatpush1.msra.mxu0 0.0
    %398 = vmatprep.subr.mxu0 0.0
    %399 = vmatpush1.msra.mxu0 0.0
    %400 = vmatprep.subr.mxu0 0.0
    %401 = vmatpush1.msra.mxu0 0.0
    %402 = vmatprep.subr.mxu0 0.0
    %403 = vmatpush1.msra.mxu0 0.0
    %404 = vmatprep.subr.mxu0 0.0
    %405 = vmatpush1.msra.mxu0 0.0
    %406 = vmatprep.subr.mxu0 0.0
    %407 = vmatpush1.msra.mxu0 0.0
    %408 = vmatprep.subr.mxu0 0.0
    %409 = vmatpush1.msra.mxu0 0.0
    %410 = vmatprep.subr.mxu0 0.0
    %411 = vmatpush1.msra.mxu0 0.0
    %412 = vmatprep.subr.mxu0 0.0
    %413 = vmatpush1.msra.mxu0 0.0
    %414 = vmatprep.subr.mxu0 0.0
    %415 = vmatpush1.msra.mxu0 %v31
    %416 = vmatprep.subr.mxu0 0.0
    %417 = vmatpush1.msra.mxu0 %v30
    %418 = vmatprep.subr.mxu0 0.0
    %419 = vmatpush2.msra.mxu0 0.0
    %420 = vmatprep.subr.mxu0 0.0
    %421 = vmatpush2.msra.mxu0 0.0
    %422 = vmatprep.subr.mxu0 0.0
    %423 = vmatpush2.msra.mxu0 0.0
    %424 = vmatprep.subr.mxu0 0.0
    %425 = vmatpush2.msra.mxu0 0.0
    %426 = vmatprep.subr.mxu0 0.0
    %427 = vmatpush2.msra.mxu0 0.0
    %428 = vmatprep.subr.mxu0 0.0
    %429 = vmatpush2.msra.mxu0 0.0
    %430 = vmatprep.subr.mxu0 0.0
    %431 = vmatpush2.msra.mxu0 0.0
    %432 = vmatprep.subr.mxu0 0.0
    %433 = vmatpush2.msra.mxu0 0.0
    %434 = vmatprep.subr.mxu0 0.0
    %435 = vmatpush2.msra.mxu0 0.0
    %436 = vmatprep.subr.mxu0 0.0
    %437 = vmatpush2.msra.mxu0 0.0
    %438 = vmatprep.subr.mxu0 0.0
    %439 = vmatpush2.msra.mxu0 0.0
    %440 = vmatprep.subr.mxu0 0.0
    %441 = vmatpush2.msra.mxu0 0.0
    %442 = vmatprep.subr.mxu0 0.0
    %443 = vmatpush2.msra.mxu0 0.0
    %444 = vmatprep.subr.mxu0 0.0
    %445 = vmatpush2.msra.mxu0 0.0
    %446 = vmatprep.subr.mxu0 0.0
    %447 = vmatpush2.msra.mxu0 0.0
    %448 = vmatprep.subr.mxu0 0.0
    %449 = vmatpush2.msra.mxu0 0.0
    %450 = vmatprep.mubr.f32.mxu0 0.0
    %451 = vmatmul.mubr.f32.gmra.mxu0 %v384
    %v452 = vpop.f32.mrf.mxu0
    %v453 = vadd.f32 0.0, %v452
    %v454 = vpop.f32.mrf.mxu0
    %455 = vdwg.mxu0
    %v456 = vadd.f32 %v165, %v453
    %v457 = vtanh.pop %v456
    %v459 = vsel %vm39, %v457, 0
    %461 = vmatprep.subr.mxu0 0.0
    %462 = vmatpush1.msra.mxu0 0.0
    %463 = vmatprep.subr.mxu0 0.0
    %464 = vmatpush1.msra.mxu0 0.0
    %465 = vmatprep.subr.mxu0 0.0
    %466 = vmatpush1.msra.mxu0 0.0
    %467 = vmatprep.subr.mxu0 0.0
    %468 = vmatpush1.msra.mxu0 0.0
    %469 = vmatprep.subr.mxu0 0.0
    %470 = vmatpush1.msra.mxu0 0.0
    %471 = vmatprep.subr.mxu0 0.0
    %472 = vmatpush1.msra.mxu0 0.0
    %473 = vmatprep.subr.mxu0 0.0
    %474 = vmatpush1.msra.mxu0 0.0
    %475 = vmatprep.subr.mxu0 0.0
    %476 = vmatpush1.msra.mxu0 0.0
    %477 = vmatprep.subr.mxu0 0.0
    %478 = vmatpush1.msra.mxu0 0.0
    %479 = vmatprep.subr.mxu0 0.0
    %480 = vmatpush1.msra.mxu0 0.0
    %481 = vmatprep.subr.mxu0 0.0
    %482 = vmatpush1.msra.mxu0 0.0
    %483 = vmatprep.subr.mxu0 0.0
    %484 = vmatpush1.msra.mxu0 0.0
    %485 = vmatprep.subr.mxu0 0.0
    %486 = vmatpush1.msra.mxu0 0.0
    %487 = vmatprep.subr.mxu0 0.0
    %488 = vmatpush1.msra.mxu0 0.0
    %489 = vmatprep.subr.mxu0 0.0
    %490 = vmatpush1.msra.mxu0 %v31
    %491 = vmatprep.subr.mxu0 0.0
    %492 = vmatpush1.msra.mxu0 %v30
    %493 = vmatprep.subr.mxu0 0.0
    %494 = vmatpush2.msra.mxu0 0.0
    %495 = vmatprep.subr.mxu0 0.0
    %496 = vmatpush2.msra.mxu0 0.0
    %497 = vmatprep.subr.mxu0 0.0
    %498 = vmatpush2.msra.mxu0 0.0
    %499 = vmatprep.subr.mxu0 0.0
    %500 = vmatpush2.msra.mxu0 0.0
    %501 = vmatprep.subr.mxu0 0.0
    %502 = vmatpush2.msra.mxu0 0.0
    %503 = vmatprep.subr.mxu0 0.0
    %504 = vmatpush2.msra.mxu0 0.0
    %505 = vmatprep.subr.mxu0 0.0
    %506 = vmatpush2.msra.mxu0 0.0
    %507 = vmatprep.subr.mxu0 0.0
    %508 = vmatpush2.msra.mxu0 0.0
    %509 = vmatprep.subr.mxu0 0.0
    %510 = vmatpush2.msra.mxu0 0.0
    %511 = vmatprep.subr.mxu0 0.0
    %512 = vmatpush2.msra.mxu0 0.0
    %513 = vmatprep.subr.mxu0 0.0
    %514 = vmatpush2.msra.mxu0 0.0
    %515 = vmatprep.subr.mxu0 0.0
    %516 = vmatpush2.msra.mxu0 0.0
    %517 = vmatprep.subr.mxu0 0.0
    %518 = vmatpush2.msra.mxu0 0.0
    %519 = vmatprep.subr.mxu0 0.0
    %520 = vmatpush2.msra.mxu0 0.0
    %521 = vmatprep.subr.mxu0 0.0
    %522 = vmatpush2.msra.mxu0 0.0
    %523 = vmatprep.subr.mxu0 0.0
    %524 = vmatpush2.msra.mxu0 0.0
    %525 = vmatprep.mubr.f32.mxu0 0.0
    %526 = vmatmul.mubr.f32.gmra.mxu0 %v459
    %v527 = vpop.f32.mrf.mxu0
    %v528 = vadd.f32 0.0, %v527
    %v529 = vpop.f32.mrf.mxu0
    %530 = vdwg.mxu0
    %v531 = vadd.f32 %v170, %v528
    %v532 = vtanh.pop %v531
    %v534 = vsel %vm39, %v532, 0
    %536 = vmatprep.subr.mxu0 0.0
    %537 = vmatpush1.msra.mxu0 0.0
    %538 = vmatprep.subr.mxu0 0.0
    %539 = vmatpush1.msra.mxu0 0.0
    %540 = vmatprep.subr.mxu0 0.0
    %541 = vmatpush1.msra.mxu0 0.0
    %542 = vmatprep.subr.mxu0 0.0
    %543 = vmatpush1.msra.mxu0 0.0
    %544 = vmatprep.subr.mxu0 0.0
    %545 = vmatpush1.msra.mxu0 0.0
    %546 = vmatprep.subr.mxu0 0.0
    %547 = vmatpush1.msra.mxu0 0.0
    %548 = vmatprep.subr.mxu0 0.0
    %549 = vmatpush1.msra.mxu0 0.0
    %550 = vmatprep.subr.mxu0 0.0
    %551 = vmatpush1.msra.mxu0 0.0
    %552 = vmatprep.subr.mxu0 0.0
    %553 = vmatpush1.msra.mxu0 0.0
    %554 = vmatprep.subr.mxu0 0.0
    %555 = vmatpush1.msra.mxu0 0.0
    %556 = vmatprep.subr.mxu0 0.0
    %557 = vmatpush1.msra.mxu0 0.0
    %558 = vmatprep.subr.mxu0 0.0
    %559 = vmatpush1.msra.mxu0 0.0
    %560 = vmatprep.subr.mxu0 0.0
    %561 = vmatpush1.msra.mxu0 0.0
    %562 = vmatprep.subr.mxu0 0.0
    %563 = vmatpush1.msra.mxu0 0.0
    %564 = vmatprep.subr.mxu0 0.0
    %565 = vmatpush1.msra.mxu0 %v31
    %566 = vmatprep.subr.mxu0 0.0
    %567 = vmatpush1.msra.mxu0 %v30
    %568 = vmatprep.subr.mxu0 0.0
    %569 = vmatpush2.msra.mxu0 0.0
    %570 = vmatprep.subr.mxu0 0.0
    %571 = vmatpush2.msra.mxu0 0.0
    %572 = vmatprep.subr.mxu0 0.0
    %573 = vmatpush2.msra.mxu0 0.0
    %574 = vmatprep.subr.mxu0 0.0
    %575 = vmatpush2.msra.mxu0 0.0
    %576 = vmatprep.subr.mxu0 0.0
    %577 = vmatpush2.msra.mxu0 0.0
    %578 = vmatprep.subr.mxu0 0.0
    %579 = vmatpush2.msra.mxu0 0.0
    %580 = vmatprep.subr.mxu0 0.0
    %581 = vmatpush2.msra.mxu0 0.0
    %582 = vmatprep.subr.mxu0 0.0
    %583 = vmatpush2.msra.mxu0 0.0
    %584 = vmatprep.subr.mxu0 0.0
    %585 = vmatpush2.msra.mxu0 0.0
    %586 = vmatprep.subr.mxu0 0.0
    %587 = vmatpush2.msra.mxu0 0.0
    %588 = vmatprep.subr.mxu0 0.0
    %589 = vmatpush2.msra.mxu0 0.0
    %590 = vmatprep.subr.mxu0 0.0
    %591 = vmatpush2.msra.mxu0 0.0
    %592 = vmatprep.subr.mxu0 0.0
    %593 = vmatpush2.msra.mxu0 0.0
    %594 = vmatprep.subr.mxu0 0.0
    %595 = vmatpush2.msra.mxu0 0.0
    %596 = vmatprep.subr.mxu0 0.0
    %597 = vmatpush2.msra.mxu0 0.0
    %598 = vmatprep.subr.mxu0 0.0
    %599 = vmatpush2.msra.mxu0 0.0
    %600 = vmatprep.mubr.f32.mxu0 0.0
    %601 = vmatmul.mubr.f32.gmra.mxu0 %v534
    %v602 = vpop.f32.mrf.mxu0
    %v603 = vadd.f32 0.0, %v602
    %v604 = vpop.f32.mrf.mxu0
    %605 = vdwg.mxu0
    %v606 = vadd.f32 %v175, %v603
    %v607 = vtanh.pop %v606
    %v609 = vsel %vm39, %v607, 0
    %611 = vmatprep.subr.mxu0 0.0
    %612 = vmatpush1.msra.mxu0 0.0
    %613 = vmatprep.subr.mxu0 0.0
    %614 = vmatpush1.msra.mxu0 0.0
    %615 = vmatprep.subr.mxu0 0.0
    %616 = vmatpush1.msra.mxu0 0.0
    %617 = vmatprep.subr.mxu0 0.0
    %618 = vmatpush1.msra.mxu0 0.0
    %619 = vmatprep.subr.mxu0 0.0
    %620 = vmatpush1.msra.mxu0 0.0
    %621 = vmatprep.subr.mxu0 0.0
    %622 = vmatpush1.msra.mxu0 0.0
    %623 = vmatprep.subr.mxu0 0.0
    %624 = vmatpush1.msra.mxu0 0.0
    %625 = vmatprep.subr.mxu0 0.0
    %626 = vmatpush1.msra.mxu0 0.0
    %627 = vmatprep.subr.mxu0 0.0
    %628 = vmatpush1.msra.mxu0 0.0
    %629 = vmatprep.subr.mxu0 0.0
    %630 = vmatpush1.msra.mxu0 0.0
    %631 = vmatprep.subr.mxu0 0.0
    %632 = vmatpush1.msra.mxu0 0.0
    %633 = vmatprep.subr.mxu0 0.0
    %634 = vmatpush1.msra.mxu0 0.0
    %635 = vmatprep.subr.mxu0 0.0
    %636 = vmatpush1.msra.mxu0 0.0
    %637 = vmatprep.subr.mxu0 0.0
    %638 = vmatpush1.msra.mxu0 0.0
    %639 = vmatprep.subr.mxu0 0.0
    %640 = vmatpush1.msra.mxu0 %v31
    %641 = vmatprep.subr.mxu0 0.0
    %642 = vmatpush1.msra.mxu0 %v30
    %643 = vmatprep.subr.mxu0 0.0
    %644 = vmatpush2.msra.mxu0 0.0
    %645 = vmatprep.subr.mxu0 0.0
    %646 = vmatpush2.msra.mxu0 0.0
    %647 = vmatprep.subr.mxu0 0.0
    %648 = vmatpush2.msra.mxu0 0.0
    %649 = vmatprep.subr.mxu0 0.0
    %650 = vmatpush2.msra.mxu0 0.0
    %651 = vmatprep.subr.mxu0 0.0
    %652 = vmatpush2.msra.mxu0 0.0
    %653 = vmatprep.subr.mxu0 0.0
    %654 = vmatpush2.msra.mxu0 0.0
    %655 = vmatprep.subr.mxu0 0.0
    %656 = vmatpush2.msra.mxu0 0.0
    %657 = vmatprep.subr.mxu0 0.0
    %658 = vmatpush2.msra.mxu0 0.0
    %659 = vmatprep.subr.mxu0 0.0
    %660 = vmatpush2.msra.mxu0 0.0
    %661 = vmatprep.subr.mxu0 0.0
    %662 = vmatpush2.msra.mxu0 0.0
    %663 = vmatprep.subr.mxu0 0.0
    %664 = vmatpush2.msra.mxu0 0.0
    %665 = vmatprep.subr.mxu0 0.0
    %666 = vmatpush2.msra.mxu0 0.0
    %667 = vmatprep.subr.mxu0 0.0
    %668 = vmatpush2.msra.mxu0 0.0
    %669 = vmatprep.subr.mxu0 0.0
    %670 = vmatpush2.msra.mxu0 0.0
    %671 = vmatprep.subr.mxu0 0.0
    %672 = vmatpush2.msra.mxu0 0.0
    %673 = vmatprep.subr.mxu0 0.0
    %674 = vmatpush2.msra.mxu0 0.0
    %675 = vmatprep.mubr.f32.mxu0 0.0
    %676 = vmatmul.mubr.f32.gmra.mxu0 %v609
    %v677 = vpop.f32.mrf.mxu0
    %v678 = vadd.f32 0.0, %v677
    %v679 = vpop.f32.mrf.mxu0
    %680 = vdwg.mxu0
    %v681 = vadd.f32 %v180, %v678
    %v682 = vtanh.pop %v681
    %v684 = vsel %vm39, %v682, 0
    %686 = vmatprep.subr.mxu0 0.0
    %687 = vmatpush1.msra.mxu0 0.0
    %688 = vmatprep.subr.mxu0 0.0
    %689 = vmatpush1.msra.mxu0 0.0
    %690 = vmatprep.subr.mxu0 0.0
    %691 = vmatpush1.msra.mxu0 0.0
    %692 = vmatprep.subr.mxu0 0.0
    %693 = vmatpush1.msra.mxu0 0.0
    %694 = vmatprep.subr.mxu0 0.0
    %695 = vmatpush1.msra.mxu0 0.0
    %696 = vmatprep.subr.mxu0 0.0
    %697 = vmatpush1.msra.mxu0 0.0
    %698 = vmatprep.subr.mxu0 0.0
    %699 = vmatpush1.msra.mxu0 0.0
    %700 = vmatprep.subr.mxu0 0.0
    %701 = vmatpush1.msra.mxu0 0.0
    %702 = vmatprep.subr.mxu0 0.0
    %703 = vmatpush1.msra.mxu0 0.0
    %704 = vmatprep.subr.mxu0 0.0
    %705 = vmatpush1.msra.mxu0 0.0
    %706 = vmatprep.subr.mxu0 0.0
    %707 = vmatpush1.msra.mxu0 0.0
    %708 = vmatprep.subr.mxu0 0.0
    %709 = vmatpush1.msra.mxu0 0.0
    %710 = vmatprep.subr.mxu0 0.0
    %711 = vmatpush1.msra.mxu0 0.0
    %712 = vmatprep.subr.mxu0 0.0
    %713 = vmatpush1.msra.mxu0 0.0
    %714 = vmatprep.subr.mxu0 0.0
    %715 = vmatpush1.msra.mxu0 %v31
    %716 = vmatprep.subr.mxu0 0.0
    %717 = vmatpush1.msra.mxu0 %v30
    %718 = vmatprep.subr.mxu0 0.0
    %719 = vmatpush2.msra.mxu0 0.0
    %720 = vmatprep.subr.mxu0 0.0
    %721 = vmatpush2.msra.mxu0 0.0
    %722 = vmatprep.subr.mxu0 0.0
    %723 = vmatpush2.msra.mxu0 0.0
    %724 = vmatprep.subr.mxu0 0.0
    %725 = vmatpush2.msra.mxu0 0.0
    %726 = vmatprep.subr.mxu0 0.0
    %727 = vmatpush2.msra.mxu0 0.0
    %728 = vmatprep.subr.mxu0 0.0
    %729 = vmatpush2.msra.mxu0 0.0
    %730 = vmatprep.subr.mxu0 0.0
    %731 = vmatpush2.msra.mxu0 0.0
    %732 = vmatprep.subr.mxu0 0.0
    %733 = vmatpush2.msra.mxu0 0.0
    %734 = vmatprep.subr.mxu0 0.0
    %735 = vmatpush2.msra.mxu0 0.0
    %736 = vmatprep.subr.mxu0 0.0
    %737 = vmatpush2.msra.mxu0 0.0
    %738 = vmatprep.subr.mxu0 0.0
    %739 = vmatpush2.msra.mxu0 0.0
    %740 = vmatprep.subr.mxu0 0.0
    %741 = vmatpush2.msra.mxu0 0.0
    %742 = vmatprep.subr.mxu0 0.0
    %743 = vmatpush2.msra.mxu0 0.0
    %744 = vmatprep.subr.mxu0 0.0
    %745 = vmatpush2.msra.mxu0 0.0
    %746 = vmatprep.subr.mxu0 0.0
    %747 = vmatpush2.msra.mxu0 0.0
    %748 = vmatprep.subr.mxu0 0.0
    %749 = vmatpush2.msra.mxu0 0.0
    %750 = vmatprep.mubr.f32.mxu0 0.0
    %751 = vmatmul.mubr.f32.gmra.mxu0 %v684
    %v752 = vpop.f32.mrf.mxu0
    %v753 = vadd.f32 0.0, %v752
    %v754 = vpop.f32.mrf.mxu0
    %755 = vdwg.mxu0
    %v756 = vadd.f32 %v185, %v753
    %v757 = vtanh.pop %v756
    %v759 = vsel %vm39, %v757, 0
    %761 = vmatprep.subr.mxu0 0.0
    %762 = vmatpush1.msra.mxu0 0.0
    %763 = vmatprep.subr.mxu0 0.0
    %764 = vmatpush1.msra.mxu0 0.0
    %765 = vmatprep.subr.mxu0 0.0
    %766 = vmatpush1.msra.mxu0 0.0
    %767 = vmatprep.subr.mxu0 0.0
    %768 = vmatpush1.msra.mxu0 0.0
    %769 = vmatprep.subr.mxu0 0.0
    %770 = vmatpush1.msra.mxu0 0.0
    %771 = vmatprep.subr.mxu0 0.0
    %772 = vmatpush1.msra.mxu0 0.0
    %773 = vmatprep.subr.mxu0 0.0
    %774 = vmatpush1.msra.mxu0 0.0
    %775 = vmatprep.subr.mxu0 0.0
    %776 = vmatpush1.msra.mxu0 0.0
    %777 = vmatprep.subr.mxu0 0.0
    %778 = vmatpush1.msra.mxu0 0.0
    %779 = vmatprep.subr.mxu0 0.0
    %780 = vmatpush1.msra.mxu0 0.0
    %781 = vmatprep.subr.mxu0 0.0
    %782 = vmatpush1.msra.mxu0 0.0
    %783 = vmatprep.subr.mxu0 0.0
    %784 = vmatpush1.msra.mxu0 0.0
    %785 = vmatprep.subr.mxu0 0.0
    %786 = vmatpush1.msra.mxu0 0.0
    %787 = vmatprep.subr.mxu0 0.0
    %788 = vmatpush1.msra.mxu0 0.0
    %789 = vmatprep.subr.mxu0 0.0
    %790 = vmatpush1.msra.mxu0 %v31
    %791 = vmatprep.subr.mxu0 0.0
    %792 = vmatpush1.msra.mxu0 %v30
    %793 = vmatprep.subr.mxu0 0.0
    %794 = vmatpush2.msra.mxu0 0.0
    %795 = vmatprep.subr.mxu0 0.0
    %796 = vmatpush2.msra.mxu0 0.0
    %797 = vmatprep.subr.mxu0 0.0
    %798 = vmatpush2.msra.mxu0 0.0
    %799 = vmatprep.subr.mxu0 0.0
    %800 = vmatpush2.msra.mxu0 0.0
    %801 = vmatprep.subr.mxu0 0.0
    %802 = vmatpush2.msra.mxu0 0.0
    %803 = vmatprep.subr.mxu0 0.0
    %804 = vmatpush2.msra.mxu0 0.0
    %805 = vmatprep.subr.mxu0 0.0
    %806 = vmatpush2.msra.mxu0 0.0
    %807 = vmatprep.subr.mxu0 0.0
    %808 = vmatpush2.msra.mxu0 0.0
    %809 = vmatprep.subr.mxu0 0.0
    %810 = vmatpush2.msra.mxu0 0.0
    %811 = vmatprep.subr.mxu0 0.0
    %812 = vmatpush2.msra.mxu0 0.0
    %813 = vmatprep.subr.mxu0 0.0
    %814 = vmatpush2.msra.mxu0 0.0
    %815 = vmatprep.subr.mxu0 0.0
    %816 = vmatpush2.msra.mxu0 0.0
    %817 = vmatprep.subr.mxu0 0.0
    %818 = vmatpush2.msra.mxu0 0.0
    %819 = vmatprep.subr.mxu0 0.0
    %820 = vmatpush2.msra.mxu0 0.0
    %821 = vmatprep.subr.mxu0 0.0
    %822 = vmatpush2.msra.mxu0 0.0
    %823 = vmatprep.subr.mxu0 0.0
    %824 = vmatpush2.msra.mxu0 0.0
    %825 = vmatprep.mubr.f32.mxu0 0.0
    %826 = vmatmul.mubr.f32.gmra.mxu0 %v759
    %v827 = vpop.f32.mrf.mxu0
    %v828 = vadd.f32 0.0, %v827
    %v829 = vpop.f32.mrf.mxu0
    %830 = vdwg.mxu0
    %v831 = vadd.f32 %v190, %v828
    %v832 = vtanh.pop %v831
    %v834 = vsel %vm39, %v832, 0
    %836 = vmatprep.subr.mxu0 0.0
    %837 = vmatpush1.msra.mxu0 0.0
    %838 = vmatprep.subr.mxu0 0.0
    %839 = vmatpush1.msra.mxu0 0.0
    %840 = vmatprep.subr.mxu0 0.0
    %841 = vmatpush1.msra.mxu0 0.0
    %842 = vmatprep.subr.mxu0 0.0
    %843 = vmatpush1.msra.mxu0 0.0
    %844 = vmatprep.subr.mxu0 0.0
    %845 = vmatpush1.msra.mxu0 0.0
    %846 = vmatprep.subr.mxu0 0.0
    %847 = vmatpush1.msra.mxu0 0.0
    %848 = vmatprep.subr.mxu0 0.0
    %849 = vmatpush1.msra.mxu0 0.0
    %850 = vmatprep.subr.mxu0 0.0
    %851 = vmatpush1.msra.mxu0 0.0
    %852 = vmatprep.subr.mxu0 0.0
    %853 = vmatpush1.msra.mxu0 0.0
    %854 = vmatprep.subr.mxu0 0.0
    %855 = vmatpush1.msra.mxu0 0.0
    %856 = vmatprep.subr.mxu0 0.0
    %857 = vmatpush1.msra.mxu0 0.0
    %858 = vmatprep.subr.mxu0 0.0
    %859 = vmatpush1.msra.mxu0 0.0
    %860 = vmatprep.subr.mxu0 0.0
    %861 = vmatpush1.msra.mxu0 0.0
    %862 = vmatprep.subr.mxu0 0.0
    %863 = vmatpush1.msra.mxu0 0.0
    %864 = vmatprep.subr.mxu0 0.0
    %865 = vmatpush1.msra.mxu0 %v31
    %866 = vmatprep.subr.mxu0 0.0
    %867 = vmatpush1.msra.mxu0 %v30
    %868 = vmatprep.subr.mxu0 0.0
    %869 = vmatpush2.msra.mxu0 0.0
    %870 = vmatprep.subr.mxu0 0.0
    %871 = vmatpush2.msra.mxu0 0.0
    %872 = vmatprep.subr.mxu0 0.0
    %873 = vmatpush2.msra.mxu0 0.0
    %874 = vmatprep.subr.mxu0 0.0
    %875 = vmatpush2.msra.mxu0 0.0
    %876 = vmatprep.subr.mxu0 0.0
    %877 = vmatpush2.msra.mxu0 0.0
    %878 = vmatprep.subr.mxu0 0.0
    %879 = vmatpush2.msra.mxu0 0.0
    %880 = vmatprep.subr.mxu0 0.0
    %881 = vmatpush2.msra.mxu0 0.0
    %882 = vmatprep.subr.mxu0 0.0
    %883 = vmatpush2.msra.mxu0 0.0
    %884 = vmatprep.subr.mxu0 0.0
    %885 = vmatpush2.msra.mxu0 0.0
    %886 = vmatprep.subr.mxu0 0.0
    %887 = vmatpush2.msra.mxu0 0.0
    %888 = vmatprep.subr.mxu0 0.0
    %889 = vmatpush2.msra.mxu0 0.0
    %890 = vmatprep.subr.mxu0 0.0
    %891 = vmatpush2.msra.mxu0 0.0
    %892 = vmatprep.subr.mxu0 0.0
    %893 = vmatpush2.msra.mxu0 0.0
    %894 = vmatprep.subr.mxu0 0.0
    %895 = vmatpush2.msra.mxu0 0.0
    %896 = vmatprep.subr.mxu0 0.0
    %897 = vmatpush2.msra.mxu0 0.0
    %898 = vmatprep.subr.mxu0 0.0
    %899 = vmatpush2.msra.mxu0 0.0
    %900 = vmatprep.mubr.f32.mxu0 0.0
    %901 = vmatmul.mubr.f32.gmra.mxu0 %v834
    %v902 = vpop.f32.mrf.mxu0
    %v903 = vadd.f32 0.0, %v902
    %v904 = vpop.f32.mrf.mxu0
    %905 = vdwg.mxu0
    %v906 = vadd.f32 %v195, %v903
    %v907 = vtanh.pop %v906
    %v909 = vsel %vm39, %v907, 0
    %911 = vmatprep.subr.mxu0 0.0
    %912 = vmatpush1.msra.mxu0 0.0
    %913 = vmatprep.subr.mxu0 0.0
    %914 = vmatpush1.msra.mxu0 0.0
    %915 = vmatprep.subr.mxu0 0.0
    %916 = vmatpush1.msra.mxu0 0.0
    %917 = vmatprep.subr.mxu0 0.0
    %918 = vmatpush1.msra.mxu0 0.0
    %919 = vmatprep.subr.mxu0 0.0
    %920 = vmatpush1.msra.mxu0 0.0
    %921 = vmatprep.subr.mxu0 0.0
    %922 = vmatpush1.msra.mxu0 0.0
    %923 = vmatprep.subr.mxu0 0.0
    %924 = vmatpush1.msra.mxu0 0.0
    %925 = vmatprep.subr.mxu0 0.0
    %926 = vmatpush1.msra.mxu0 0.0
    %927 = vmatprep.subr.mxu0 0.0
    %928 = vmatpush1.msra.mxu0 0.0
    %929 = vmatprep.subr.mxu0 0.0
    %930 = vmatpush1.msra.mxu0 0.0
    %931 = vmatprep.subr.mxu0 0.0
    %932 = vmatpush1.msra.mxu0 0.0
    %933 = vmatprep.subr.mxu0 0.0
    %934 = vmatpush1.msra.mxu0 0.0
    %935 = vmatprep.subr.mxu0 0.0
    %936 = vmatpush1.msra.mxu0 0.0
    %937 = vmatprep.subr.mxu0 0.0
    %938 = vmatpush1.msra.mxu0 0.0
    %939 = vmatprep.subr.mxu0 0.0
    %940 = vmatpush1.msra.mxu0 %v31
    %941 = vmatprep.subr.mxu0 0.0
    %942 = vmatpush1.msra.mxu0 %v30
    %943 = vmatprep.subr.mxu0 0.0
    %944 = vmatpush2.msra.mxu0 0.0
    %945 = vmatprep.subr.mxu0 0.0
    %946 = vmatpush2.msra.mxu0 0.0
    %947 = vmatprep.subr.mxu0 0.0
    %948 = vmatpush2.msra.mxu0 0.0
    %949 = vmatprep.subr.mxu0 0.0
    %950 = vmatpush2.msra.mxu0 0.0
    %951 = vmatprep.subr.mxu0 0.0
    %952 = vmatpush2.msra.mxu0 0.0
    %953 = vmatprep.subr.mxu0 0.0
    %954 = vmatpush2.msra.mxu0 0.0
    %955 = vmatprep.subr.mxu0 0.0
    %956 = vmatpush2.msra.mxu0 0.0
    %957 = vmatprep.subr.mxu0 0.0
    %958 = vmatpush2.msra.mxu0 0.0
    %959 = vmatprep.subr.mxu0 0.0
    %960 = vmatpush2.msra.mxu0 0.0
    %961 = vmatprep.subr.mxu0 0.0
    %962 = vmatpush2.msra.mxu0 0.0
    %963 = vmatprep.subr.mxu0 0.0
    %964 = vmatpush2.msra.mxu0 0.0
    %965 = vmatprep.subr.mxu0 0.0
    %966 = vmatpush2.msra.mxu0 0.0
    %967 = vmatprep.subr.mxu0 0.0
    %968 = vmatpush2.msra.mxu0 0.0
    %969 = vmatprep.subr.mxu0 0.0
    %970 = vmatpush2.msra.mxu0 0.0
    %971 = vmatprep.subr.mxu0 0.0
    %972 = vmatpush2.msra.mxu0 0.0
    %973 = vmatprep.subr.mxu0 0.0
    %974 = vmatpush2.msra.mxu0 0.0
    %975 = vmatprep.mubr.f32.mxu0 0.0
    %976 = vmatmul.mubr.f32.gmra.mxu0 %v909
    %v977 = vpop.f32.mrf.mxu0
    %v978 = vadd.f32 0.0, %v977
    %v979 = vpop.f32.mrf.mxu0
    %980 = vdwg.mxu0
    %v981 = vadd.f32 %v200, %v978
    %v982 = vtanh.pop %v981
    %v984 = vsel %vm39, %v982, 0
    %986 = vmatprep.subr.mxu0 0.0
    %987 = vmatpush1.msra.mxu0 0.0
    %988 = vmatprep.subr.mxu0 0.0
    %989 = vmatpush1.msra.mxu0 0.0
    %990 = vmatprep.subr.mxu0 0.0
    %991 = vmatpush1.msra.mxu0 0.0
    %992 = vmatprep.subr.mxu0 0.0
    %993 = vmatpush1.msra.mxu0 0.0
    %994 = vmatprep.subr.mxu0 0.0
    %995 = vmatpush1.msra.mxu0 0.0
    %996 = vmatprep.subr.mxu0 0.0
    %997 = vmatpush1.msra.mxu0 0.0
    %998 = vmatprep.subr.mxu0 0.0
    %999 = vmatpush1.msra.mxu0 0.0
    %1000 = vmatprep.subr.mxu0 0.0
    %1001 = vmatpush1.msra.mxu0 0.0
    %1002 = vmatprep.subr.mxu0 0.0
    %1003 = vmatpush1.msra.mxu0 0.0
    %1004 = vmatprep.subr.mxu0 0.0
    %1005 = vmatpush1.msra.mxu0 0.0
    %1006 = vmatprep.subr.mxu0 0.0
    %1007 = vmatpush1.msra.mxu0 0.0
    %1008 = vmatprep.subr.mxu0 0.0
    %1009 = vmatpush1.msra.mxu0 0.0
    %1010 = vmatprep.subr.mxu0 0.0
    %1011 = vmatpush1.msra.mxu0 0.0
    %1012 = vmatprep.subr.mxu0 0.0
    %1013 = vmatpush1.msra.mxu0 0.0
    %1014 = vmatprep.subr.mxu0 0.0
    %1015 = vmatpush1.msra.mxu0 %v31
    %1016 = vmatprep.subr.mxu0 0.0
    %1017 = vmatpush1.msra.mxu0 %v30
    %1018 = vmatprep.subr.mxu0 0.0
    %1019 = vmatpush2.msra.mxu0 0.0
    %1020 = vmatprep.subr.mxu0 0.0
    %1021 = vmatpush2.msra.mxu0 0.0
    %1022 = vmatprep.subr.mxu0 0.0
    %1023 = vmatpush2.msra.mxu0 0.0
    %1024 = vmatprep.subr.mxu0 0.0
    %1025 = vmatpush2.msra.mxu0 0.0
    %1026 = vmatprep.subr.mxu0 0.0
    %1027 = vmatpush2.msra.mxu0 0.0
    %1028 = vmatprep.subr.mxu0 0.0
    %1029 = vmatpush2.msra.mxu0 0.0
    %1030 = vmatprep.subr.mxu0 0.0
    %1031 = vmatpush2.msra.mxu0 0.0
    %1032 = vmatprep.subr.mxu0 0.0
    %1033 = vmatpush2.msra.mxu0 0.0
    %1034 = vmatprep.subr.mxu0 0.0
    %1035 = vmatpush2.msra.mxu0 0.0
    %1036 = vmatprep.subr.mxu0 0.0
    %1037 = vmatpush2.msra.mxu0 0.0
    %1038 = vmatprep.subr.mxu0 0.0
    %1039 = vmatpush2.msra.mxu0 0.0
    %1040 = vmatprep.subr.mxu0 0.0
    %1041 = vmatpush2.msra.mxu0 0.0
    %1042 = vmatprep.subr.mxu0 0.0
    %1043 = vmatpush2.msra.mxu0 0.0
    %1044 = vmatprep.subr.mxu0 0.0
    %1045 = vmatpush2.msra.mxu0 0.0
    %1046 = vmatprep.subr.mxu0 0.0
    %1047 = vmatpush2.msra.mxu0 0.0
    %1048 = vmatprep.subr.mxu0 0.0
    %1049 = vmatpush2.msra.mxu0 0.0
    %1050 = vmatprep.mubr.f32.mxu0 0.0
    %1051 = vmatmul.mubr.f32.gmra.mxu0 %v984
    %v1052 = vpop.f32.mrf.mxu0
    %v1053 = vadd.f32 0.0, %v1052
    %v1054 = vpop.f32.mrf.mxu0
    %1055 = vdwg.mxu0
    %v1056 = vadd.f32 %v205, %v1053
    %v1057 = vtanh.pop %v1056
    %v1059 = vsel %vm39, %v1057, 0
    %1061 = vmatprep.subr.mxu0 0.0
    %1062 = vmatpush1.msra.mxu0 0.0
    %1063 = vmatprep.subr.mxu0 0.0
    %1064 = vmatpush1.msra.mxu0 0.0
    %1065 = vmatprep.subr.mxu0 0.0
    %1066 = vmatpush1.msra.mxu0 0.0
    %1067 = vmatprep.subr.mxu0 0.0
    %1068 = vmatpush1.msra.mxu0 0.0
    %1069 = vmatprep.subr.mxu0 0.0
    %1070 = vmatpush1.msra.mxu0 0.0
    %1071 = vmatprep.subr.mxu0 0.0
    %1072 = vmatpush1.msra.mxu0 0.0
    %1073 = vmatprep.subr.mxu0 0.0
    %1074 = vmatpush1.msra.mxu0 0.0
    %1075 = vmatprep.subr.mxu0 0.0
    %1076 = vmatpush1.msra.mxu0 0.0
    %1077 = vmatprep.subr.mxu0 0.0
    %1078 = vmatpush1.msra.mxu0 0.0
    %1079 = vmatprep.subr.mxu0 0.0
    %1080 = vmatpush1.msra.mxu0 0.0
    %1081 = vmatprep.subr.mxu0 0.0
    %1082 = vmatpush1.msra.mxu0 0.0
    %1083 = vmatprep.subr.mxu0 0.0
    %1084 = vmatpush1.msra.mxu0 0.0
    %1085 = vmatprep.subr.mxu0 0.0
    %1086 = vmatpush1.msra.mxu0 0.0
    %1087 = vmatprep.subr.mxu0 0.0
    %1088 = vmatpush1.msra.mxu0 0.0
    %1089 = vmatprep.subr.mxu0 0.0
    %1090 = vmatpush1.msra.mxu0 %v31
    %1091 = vmatprep.subr.mxu0 0.0
    %1092 = vmatpush1.msra.mxu0 %v30
    %1093 = vmatprep.subr.mxu0 0.0
    %1094 = vmatpush2.msra.mxu0 0.0
    %1095 = vmatprep.subr.mxu0 0.0
    %1096 = vmatpush2.msra.mxu0 0.0
    %1097 = vmatprep.subr.mxu0 0.0
    %1098 = vmatpush2.msra.mxu0 0.0
    %1099 = vmatprep.subr.mxu0 0.0
    %1100 = vmatpush2.msra.mxu0 0.0
    %1101 = vmatprep.subr.mxu0 0.0
    %1102 = vmatpush2.msra.mxu0 0.0
    %1103 = vmatprep.subr.mxu0 0.0
    %1104 = vmatpush2.msra.mxu0 0.0
    %1105 = vmatprep.subr.mxu0 0.0
    %1106 = vmatpush2.msra.mxu0 0.0
    %1107 = vmatprep.subr.mxu0 0.0
    %1108 = vmatpush2.msra.mxu0 0.0
    %1109 = vmatprep.subr.mxu0 0.0
    %1110 = vmatpush2.msra.mxu0 0.0
    %1111 = vmatprep.subr.mxu0 0.0
    %1112 = vmatpush2.msra.mxu0 0.0
    %1113 = vmatprep.subr.mxu0 0.0
    %1114 = vmatpush2.msra.mxu0 0.0
    %1115 = vmatprep.subr.mxu0 0.0
    %1116 = vmatpush2.msra.mxu0 0.0
    %1117 = vmatprep.subr.mxu0 0.0
    %1118 = vmatpush2.msra.mxu0 0.0
    %1119 = vmatprep.subr.mxu0 0.0
    %1120 = vmatpush2.msra.mxu0 0.0
    %1121 = vmatprep.subr.mxu0 0.0
    %1122 = vmatpush2.msra.mxu0 0.0
    %1123 = vmatprep.subr.mxu0 0.0
    %1124 = vmatpush2.msra.mxu0 0.0
    %1125 = vmatprep.mubr.f32.mxu0 0.0
    %1126 = vmatmul.mubr.f32.gmra.mxu0 %v1059
    %v1127 = vpop.f32.mrf.mxu0
    %v1128 = vadd.f32 0.0, %v1127
    %v1129 = vpop.f32.mrf.mxu0
    %1130 = vdwg.mxu0
    %v1131 = vadd.f32 %v210, %v1128
    %v1132 = vtanh.pop %v1131
    %v1134 = vsel %vm39, %v1132, 0
    %1136 = vmatprep.subr.mxu0 0.0
    %1137 = vmatpush1.msra.mxu0 0.0
    %1138 = vmatprep.subr.mxu0 0.0
    %1139 = vmatpush1.msra.mxu0 0.0
    %1140 = vmatprep.subr.mxu0 0.0
    %1141 = vmatpush1.msra.mxu0 0.0
    %1142 = vmatprep.subr.mxu0 0.0
    %1143 = vmatpush1.msra.mxu0 0.0
    %1144 = vmatprep.subr.mxu0 0.0
    %1145 = vmatpush1.msra.mxu0 0.0
    %1146 = vmatprep.subr.mxu0 0.0
    %1147 = vmatpush1.msra.mxu0 0.0
    %1148 = vmatprep.subr.mxu0 0.0
    %1149 = vmatpush1.msra.mxu0 0.0
    %1150 = vmatprep.subr.mxu0 0.0
    %1151 = vmatpush1.msra.mxu0 0.0
    %1152 = vmatprep.subr.mxu0 0.0
    %1153 = vmatpush1.msra.mxu0 0.0
    %1154 = vmatprep.subr.mxu0 0.0
    %1155 = vmatpush1.msra.mxu0 0.0
    %1156 = vmatprep.subr.mxu0 0.0
    %1157 = vmatpush1.msra.mxu0 0.0
    %1158 = vmatprep.subr.mxu0 0.0
    %1159 = vmatpush1.msra.mxu0 0.0
    %1160 = vmatprep.subr.mxu0 0.0
    %1161 = vmatpush1.msra.mxu0 0.0
    %1162 = vmatprep.subr.mxu0 0.0
    %1163 = vmatpush1.msra.mxu0 0.0
    %1164 = vmatprep.subr.mxu0 0.0
    %1165 = vmatpush1.msra.mxu0 %v31
    %1166 = vmatprep.subr.mxu0 0.0
    %1167 = vmatpush1.msra.mxu0 %v30
    %1168 = vmatprep.subr.mxu0 0.0
    %1169 = vmatpush2.msra.mxu0 0.0
    %1170 = vmatprep.subr.mxu0 0.0
    %1171 = vmatpush2.msra.mxu0 0.0
    %1172 = vmatprep.subr.mxu0 0.0
    %1173 = vmatpush2.msra.mxu0 0.0
    %1174 = vmatprep.subr.mxu0 0.0
    %1175 = vmatpush2.msra.mxu0 0.0
    %1176 = vmatprep.subr.mxu0 0.0
    %1177 = vmatpush2.msra.mxu0 0.0
    %1178 = vmatprep.subr.mxu0 0.0
    %1179 = vmatpush2.msra.mxu0 0.0
    %1180 = vmatprep.subr.mxu0 0.0
    %1181 = vmatpush2.msra.mxu0 0.0
    %1182 = vmatprep.subr.mxu0 0.0
    %1183 = vmatpush2.msra.mxu0 0.0
    %1184 = vmatprep.subr.mxu0 0.0
    %1185 = vmatpush2.msra.mxu0 0.0
    %1186 = vmatprep.subr.mxu0 0.0
    %1187 = vmatpush2.msra.mxu0 0.0
    %1188 = vmatprep.subr.mxu0 0.0
    %1189 = vmatpush2.msra.mxu0 0.0
    %1190 = vmatprep.subr.mxu0 0.0
    %1191 = vmatpush2.msra.mxu0 0.0
    %1192 = vmatprep.subr.mxu0 0.0
    %1193 = vmatpush2.msra.mxu0 0.0
    %1194 = vmatprep.subr.mxu0 0.0
    %1195 = vmatpush2.msra.mxu0 0.0
    %1196 = vmatprep.subr.mxu0 0.0
    %1197 = vmatpush2.msra.mxu0 0.0
    %1198 = vmatprep.subr.mxu0 0.0
    %1199 = vmatpush2.msra.mxu0 0.0
    %1200 = vmatprep.mubr.f32.mxu0 0.0
    %1201 = vmatmul.mubr.f32.gmra.mxu0 %v1134
    %v1202 = vpop.f32.mrf.mxu0
    %v1203 = vadd.f32 0.0, %v1202
    %v1204 = vpop.f32.mrf.mxu0
    %1205 = vdwg.mxu0
    %v1206 = vadd.f32 %v215, %v1203
    %v1207 = vtanh.pop %v1206
    %v1209 = vsel %vm39, %v1207, 0
    %1211 = vmatprep.subr.mxu0 0.0
    %1212 = vmatpush1.msra.mxu0 0.0
    %1213 = vmatprep.subr.mxu0 0.0
    %1214 = vmatpush1.msra.mxu0 0.0
    %1215 = vmatprep.subr.mxu0 0.0
    %1216 = vmatpush1.msra.mxu0 0.0
    %1217 = vmatprep.subr.mxu0 0.0
    %1218 = vmatpush1.msra.mxu0 0.0
    %1219 = vmatprep.subr.mxu0 0.0
    %1220 = vmatpush1.msra.mxu0 0.0
    %1221 = vmatprep.subr.mxu0 0.0
    %1222 = vmatpush1.msra.mxu0 0.0
    %1223 = vmatprep.subr.mxu0 0.0
    %1224 = vmatpush1.msra.mxu0 0.0
    %1225 = vmatprep.subr.mxu0 0.0
    %1226 = vmatpush1.msra.mxu0 0.0
    %1227 = vmatprep.subr.mxu0 0.0
    %1228 = vmatpush1.msra.mxu0 0.0
    %1229 = vmatprep.subr.mxu0 0.0
    %1230 = vmatpush1.msra.mxu0 0.0
    %1231 = vmatprep.subr.mxu0 0.0
    %1232 = vmatpush1.msra.mxu0 0.0
    %1233 = vmatprep.subr.mxu0 0.0
    %1234 = vmatpush1.msra.mxu0 0.0
    %1235 = vmatprep.subr.mxu0 0.0
    %1236 = vmatpush1.msra.mxu0 0.0
    %1237 = vmatprep.subr.mxu0 0.0
    %1238 = vmatpush1.msra.mxu0 0.0
    %1239 = vmatprep.subr.mxu0 0.0
    %1240 = vmatpush1.msra.mxu0 %v31
    %1241 = vmatprep.subr.mxu0 0.0
    %1242 = vmatpush1.msra.mxu0 %v30
    %1243 = vmatprep.subr.mxu0 0.0
    %1244 = vmatpush2.msra.mxu0 0.0
    %1245 = vmatprep.subr.mxu0 0.0
    %1246 = vmatpush2.msra.mxu0 0.0
    %1247 = vmatprep.subr.mxu0 0.0
    %1248 = vmatpush2.msra.mxu0 0.0
    %1249 = vmatprep.subr.mxu0 0.0
    %1250 = vmatpush2.msra.mxu0 0.0
    %1251 = vmatprep.subr.mxu0 0.0
    %1252 = vmatpush2.msra.mxu0 0.0
    %1253 = vmatprep.subr.mxu0 0.0
    %1254 = vmatpush2.msra.mxu0 0.0
    %1255 = vmatprep.subr.mxu0 0.0
    %1256 = vmatpush2.msra.mxu0 0.0
    %1257 = vmatprep.subr.mxu0 0.0
    %1258 = vmatpush2.msra.mxu0 0.0
    %1259 = vmatprep.subr.mxu0 0.0
    %1260 = vmatpush2.msra.mxu0 0.0
    %1261 = vmatprep.subr.mxu0 0.0
    %1262 = vmatpush2.msra.mxu0 0.0
    %1263 = vmatprep.subr.mxu0 0.0
    %1264 = vmatpush2.msra.mxu0 0.0
    %1265 = vmatprep.subr.mxu0 0.0
    %1266 = vmatpush2.msra.mxu0 0.0
    %1267 = vmatprep.subr.mxu0 0.0
    %1268 = vmatpush2.msra.mxu0 0.0
    %1269 = vmatprep.subr.mxu0 0.0
    %1270 = vmatpush2.msra.mxu0 0.0
    %1271 = vmatprep.subr.mxu0 0.0
    %1272 = vmatpush2.msra.mxu0 0.0
    %1273 = vmatprep.subr.mxu0 0.0
    %1274 = vmatpush2.msra.mxu0 0.0
    %1275 = vmatprep.mubr.f32.mxu0 0.0
    %1276 = vmatmul.mubr.f32.gmra.mxu0 %v1209
    %v1277 = vpop.f32.mrf.mxu0
    %v1278 = vadd.f32 0.0, %v1277
    %v1279 = vpop.f32.mrf.mxu0
    %1280 = vdwg.mxu0
    %v1281 = vadd.f32 %v220, %v1278
    %v1282 = vtanh.pop %v1281
    %v1284 = vsel %vm39, %v1282, 0
    %1286 = vmatprep.subr.mxu0 0.0
    %1287 = vmatpush1.msra.mxu0 0.0
    %1288 = vmatprep.subr.mxu0 0.0
    %1289 = vmatpush1.msra.mxu0 0.0
    %1290 = vmatprep.subr.mxu0 0.0
    %1291 = vmatpush1.msra.mxu0 0.0
    %1292 = vmatprep.subr.mxu0 0.0
    %1293 = vmatpush1.msra.mxu0 0.0
    %1294 = vmatprep.subr.mxu0 0.0
    %1295 = vmatpush1.msra.mxu0 0.0
    %1296 = vmatprep.subr.mxu0 0.0
    %1297 = vmatpush1.msra.mxu0 0.0
    %1298 = vmatprep.subr.mxu0 0.0
    %1299 = vmatpush1.msra.mxu0 0.0
    %1300 = vmatprep.subr.mxu0 0.0
    %1301 = vmatpush1.msra.mxu0 0.0
    %1302 = vmatprep.subr.mxu0 0.0
    %1303 = vmatpush1.msra.mxu0 0.0
    %1304 = vmatprep.subr.mxu0 0.0
    %1305 = vmatpush1.msra.mxu0 0.0
    %1306 = vmatprep.subr.mxu0 0.0
    %1307 = vmatpush1.msra.mxu0 0.0
    %1308 = vmatprep.subr.mxu0 0.0
    %1309 = vmatpush1.msra.mxu0 0.0
    %1310 = vmatprep.subr.mxu0 0.0
    %1311 = vmatpush1.msra.mxu0 0.0
    %1312 = vmatprep.subr.mxu0 0.0
    %1313 = vmatpush1.msra.mxu0 0.0
    %1314 = vmatprep.subr.mxu0 0.0
    %1315 = vmatpush1.msra.mxu0 %v31
    %1316 = vmatprep.subr.mxu0 0.0
    %1317 = vmatpush1.msra.mxu0 %v30
    %1318 = vmatprep.subr.mxu0 0.0
    %1319 = vmatpush2.msra.mxu0 0.0
    %1320 = vmatprep.subr.mxu0 0.0
    %1321 = vmatpush2.msra.mxu0 0.0
    %1322 = vmatprep.subr.mxu0 0.0
    %1323 = vmatpush2.msra.mxu0 0.0
    %1324 = vmatprep.subr.mxu0 0.0
    %1325 = vmatpush2.msra.mxu0 0.0
    %1326 = vmatprep.subr.mxu0 0.0
    %1327 = vmatpush2.msra.mxu0 0.0
    %1328 = vmatprep.subr.mxu0 0.0
    %1329 = vmatpush2.msra.mxu0 0.0
    %1330 = vmatprep.subr.mxu0 0.0
    %1331 = vmatpush2.msra.mxu0 0.0
    %1332 = vmatprep.subr.mxu0 0.0
    %1333 = vmatpush2.msra.mxu0 0.0
    %1334 = vmatprep.subr.mxu0 0.0
    %1335 = vmatpush2.msra.mxu0 0.0
    %1336 = vmatprep.subr.mxu0 0.0
    %1337 = vmatpush2.msra.mxu0 0.0
    %1338 = vmatprep.subr.mxu0 0.0
    %1339 = vmatpush2.msra.mxu0 0.0
    %1340 = vmatprep.subr.mxu0 0.0
    %1341 = vmatpush2.msra.mxu0 0.0
    %1342 = vmatprep.subr.mxu0 0.0
    %1343 = vmatpush2.msra.mxu0 0.0
    %1344 = vmatprep.subr.mxu0 0.0
    %1345 = vmatpush2.msra.mxu0 0.0
    %1346 = vmatprep.subr.mxu0 0.0
    %1347 = vmatpush2.msra.mxu0 0.0
    %1348 = vmatprep.subr.mxu0 0.0
    %1349 = vmatpush2.msra.mxu0 0.0
    %1350 = vmatprep.mubr.f32.mxu0 0.0
    %1351 = vmatmul.mubr.f32.gmra.mxu0 %v1284
    %v1352 = vpop.f32.mrf.mxu0
    %v1353 = vadd.f32 0.0, %v1352
    %v1354 = vpop.f32.mrf.mxu0
    %1355 = vdwg.mxu0
    %v1356 = vadd.f32 %v225, %v1353
    %v1357 = vtanh.pop %v1356
    %v1359 = vsel %vm39, %v1357, 0
    %1361 = vmatprep.subr.mxu0 0.0
    %1362 = vmatpush1.msra.mxu0 0.0
    %1363 = vmatprep.subr.mxu0 0.0
    %1364 = vmatpush1.msra.mxu0 0.0
    %1365 = vmatprep.subr.mxu0 0.0
    %1366 = vmatpush1.msra.mxu0 0.0
    %1367 = vmatprep.subr.mxu0 0.0
    %1368 = vmatpush1.msra.mxu0 0.0
    %1369 = vmatprep.subr.mxu0 0.0
    %1370 = vmatpush1.msra.mxu0 0.0
    %1371 = vmatprep.subr.mxu0 0.0
    %1372 = vmatpush1.msra.mxu0 0.0
    %1373 = vmatprep.subr.mxu0 0.0
    %1374 = vmatpush1.msra.mxu0 0.0
    %1375 = vmatprep.subr.mxu0 0.0
    %1376 = vmatpush1.msra.mxu0 0.0
    %1377 = vmatprep.subr.mxu0 0.0
    %1378 = vmatpush1.msra.mxu0 0.0
    %1379 = vmatprep.subr.mxu0 0.0
    %1380 = vmatpush1.msra.mxu0 0.0
    %1381 = vmatprep.subr.mxu0 0.0
    %1382 = vmatpush1.msra.mxu0 0.0
    %1383 = vmatprep.subr.mxu0 0.0
    %1384 = vmatpush1.msra.mxu0 0.0
    %1385 = vmatprep.subr.mxu0 0.0
    %1386 = vmatpush1.msra.mxu0 0.0
    %1387 = vmatprep.subr.mxu0 0.0
    %1388 = vmatpush1.msra.mxu0 0.0
    %1389 = vmatprep.subr.mxu0 0.0
    %1390 = vmatpush1.msra.mxu0 %v31
    %1391 = vmatprep.subr.mxu0 0.0
    %1392 = vmatpush1.msra.mxu0 %v30
    %1393 = vmatprep.subr.mxu0 0.0
    %1394 = vmatpush2.msra.mxu0 0.0
    %1395 = vmatprep.subr.mxu0 0.0
    %1396 = vmatpush2.msra.mxu0 0.0
    %1397 = vmatprep.subr.mxu0 0.0
    %1398 = vmatpush2.msra.mxu0 0.0
    %1399 = vmatprep.subr.mxu0 0.0
    %1400 = vmatpush2.msra.mxu0 0.0
    %1401 = vmatprep.subr.mxu0 0.0
    %1402 = vmatpush2.msra.mxu0 0.0
    %1403 = vmatprep.subr.mxu0 0.0
    %1404 = vmatpush2.msra.mxu0 0.0
    %1405 = vmatprep.subr.mxu0 0.0
    %1406 = vmatpush2.msra.mxu0 0.0
    %1407 = vmatprep.subr.mxu0 0.0
    %1408 = vmatpush2.msra.mxu0 0.0
    %1409 = vmatprep.subr.mxu0 0.0
    %1410 = vmatpush2.msra.mxu0 0.0
    %1411 = vmatprep.subr.mxu0 0.0
    %1412 = vmatpush2.msra.mxu0 0.0
    %1413 = vmatprep.subr.mxu0 0.0
    %1414 = vmatpush2.msra.mxu0 0.0
    %1415 = vmatprep.subr.mxu0 0.0
    %1416 = vmatpush2.msra.mxu0 0.0
    %1417 = vmatprep.subr.mxu0 0.0
    %1418 = vmatpush2.msra.mxu0 0.0
    %1419 = vmatprep.subr.mxu0 0.0
    %1420 = vmatpush2.msra.mxu0 0.0
    %1421 = vmatprep.subr.mxu0 0.0
    %1422 = vmatpush2.msra.mxu0 0.0
    %1423 = vmatprep.subr.mxu0 0.0
    %1424 = vmatpush2.msra.mxu0 0.0
    %1425 = vmatprep.mubr.f32.mxu0 0.0
    %1426 = vmatmul.mubr.f32.gmra.mxu0 %v1359
    %v1427 = vpop.f32.mrf.mxu0
    %v1428 = vadd.f32 0.0, %v1427
    %v1429 = vpop.f32.mrf.mxu0
    %1430 = vdwg.mxu0
    %v1431 = vadd.f32 %v230, %v1428
    %v1432 = vtanh.pop %v1431
    %1433 = vst.msk [vmem:[#allocation4] sm:$0xff] %vm39, %v1432
    %v1435 = vsel %vm39, %v34, 0
    %v1438 = vsel %vm39, %v1432, 0
    %1440 = vmatprep.subr.mxu0 0.0
    %1441 = vmatpush1.xpose.msra.mxu0 %v1438
    %1442 = vmatprep.subr.mxu0 0.0
    %1443 = vmatpush1.xpose.msra.mxu0 %v1359
    %1444 = vmatprep.subr.mxu0 0.0
    %1445 = vmatpush1.xpose.msra.mxu0 %v1284
    %1446 = vmatprep.subr.mxu0 0.0
    %1447 = vmatpush1.xpose.msra.mxu0 %v1209
    %1448 = vmatprep.subr.mxu0 0.0
    %1449 = vmatpush1.xpose.msra.mxu0 %v1134
    %1450 = vmatprep.subr.mxu0 0.0
    %1451 = vmatpush1.xpose.msra.mxu0 %v1059
    %1452 = vmatprep.subr.mxu0 0.0
    %1453 = vmatpush1.xpose.msra.mxu0 %v984
    %1454 = vmatprep.subr.mxu0 0.0
    %1455 = vmatpush1.xpose.msra.mxu0 %v909
    %1456 = vmatprep.subr.mxu0 0.0
    %1457 = vmatpush1.xpose.msra.mxu0 %v834
    %1458 = vmatprep.subr.mxu0 0.0
    %1459 = vmatpush1.xpose.msra.mxu0 %v759
    %1460 = vmatprep.subr.mxu0 0.0
    %1461 = vmatpush1.xpose.msra.mxu0 %v684
    %1462 = vmatprep.subr.mxu0 0.0
    %1463 = vmatpush1.xpose.msra.mxu0 %v609
    %1464 = vmatprep.subr.mxu0 0.0
    %1465 = vmatpush1.xpose.msra.mxu0 %v534
    %1466 = vmatprep.subr.mxu0 0.0
    %1467 = vmatpush1.xpose.msra.mxu0 %v459
    %1468 = vmatprep.subr.mxu0 0.0
    %1469 = vmatpush1.xpose.msra.mxu0 %v384
    %1470 = vmatprep.subr.mxu0 0.0
    %1471 = vmatpush1.xpose.msra.mxu0 %v309
    %1472 = vmatprep.subr.mxu0 0.0
    %1473 = vmatpush2.xpose.msra.mxu0 0.0
    %1474 = vmatprep.subr.mxu0 0.0
    %1475 = vmatpush2.xpose.msra.mxu0 0.0
    %1476 = vmatprep.subr.mxu0 0.0
    %1477 = vmatpush2.xpose.msra.mxu0 0.0
    %1478 = vmatprep.subr.mxu0 0.0
    %1479 = vmatpush2.xpose.msra.mxu0 0.0
    %1480 = vmatprep.subr.mxu0 0.0
    %1481 = vmatpush2.xpose.msra.mxu0 0.0
    %1482 = vmatprep.subr.mxu0 0.0
    %1483 = vmatpush2.xpose.msra.mxu0 0.0
    %1484 = vmatprep.subr.mxu0 0.0
    %1485 = vmatpush2.xpose.msra.mxu0 0.0
    %1486 = vmatprep.subr.mxu0 0.0
    %1487 = vmatpush2.xpose.msra.mxu0 0.0
    %1488 = vmatprep.subr.mxu0 0.0
    %1489 = vmatpush2.xpose.msra.mxu0 0.0
    %1490 = vmatprep.subr.mxu0 0.0
    %1491 = vmatpush2.xpose.msra.mxu0 0.0
    %1492 = vmatprep.subr.mxu0 0.0
    %1493 = vmatpush2.xpose.msra.mxu0 0.0
    %1494 = vmatprep.subr.mxu0 0.0
    %1495 = vmatpush2.xpose.msra.mxu0 0.0
    %1496 = vmatprep.subr.mxu0 0.0
    %1497 = vmatpush2.xpose.msra.mxu0 0.0
    %1498 = vmatprep.subr.mxu0 0.0
    %1499 = vmatpush2.xpose.msra.mxu0 0.0
    %1500 = vmatprep.subr.mxu0 0.0
    %1501 = vmatpush2.xpose.msra.mxu0 0.0
    %1502 = vmatprep.subr.mxu0 0.0
    %1503 = vmatpush2.xpose.msra.mxu0 0.0
    %1504 = vmatprep.mubr.f32.mxu0 0.0
    %1505 = vmatmul.mubr.f32.gmra.mxu0 %v1435
    %v1506 = vpop.f32.mrf.mxu0
    %v1507 = vadd.f32 0.0, %v1506
    %v1508 = vpop.f32.mrf.mxu0
    %1509 = vdwg.mxu0
    %1510 = vst [vmem:[#allocation2] sm:$0x1] %v1507
    // Predicated region
    $region6: #{tpu_custom_call.1} parent=1 // pred_check
      _
    $region7: #{tpu_custom_call.1} parent=1 // pred_check_branch
      %1512 = sbr.rel (0) target = $region9
    $region8: #{tpu_custom_call.1} parent=1 // pred_region
      %s1514 = ssub.s32 16, 16
      %1515 = vsyncadd [#allocation3], %s1514
      %s1517 = sshll.u32 [#allocation2], 4
      %s1518 = int_to_ptr.vmem [resolvable:$true] %s1517
      %1520 = dma.vmem_to_hbm [thread:$0]  %s1518, 16, %s1, [#allocation3]
    $region9: #{tpu_custom_call.1} parent=1 // pred_fallthru
      _
    // Predicated region
    $region10: #{tpu_custom_call.1} parent=1 // pred_check
      _
    $region11: #{tpu_custom_call.1} parent=1 // pred_check_branch
      %1522 = sbr.rel (0) target = $region13
    $region12: #{tpu_custom_call.1} parent=1 // pred_region
      %s1524 = ssub.s32 128, 128
      %1525 = vsyncadd [#allocation5], %s1524
      %s1527 = sshll.u32 [#allocation4], 4
      %s1528 = int_to_ptr.vmem [resolvable:$true] %s1527
      %1530 = dma.vmem_to_hbm [thread:$0]  %s1528, 128, %s2, [#allocation5]
    $region13: #{tpu_custom_call.1} parent=1 // pred_fallthru
      _
    // Predicated region
    $region14: #{tpu_custom_call.1} parent=1 // pred_check
      _
    $region15: #{tpu_custom_call.1} parent=1 // pred_check_branch
      %1532 = sbr.rel (0) target = $region17
    $region16: #{tpu_custom_call.1} parent=1 // pred_region
      %1533 = dma.done [#allocation3], 16
    $region17: #{tpu_custom_call.1} parent=1 // pred_fallthru
      _
    // Predicated region
    $region18: #{tpu_custom_call.1} parent=1 // pred_check
      _
    $region19: #{tpu_custom_call.1} parent=1 // pred_check_branch
      %1535 = sbr.rel (0) target = $region21
    $region20: #{tpu_custom_call.1} parent=1 // pred_region
      %1536 = dma.done [#allocation5], 128
    $region21: #{tpu_custom_call.1} parent=1 // pred_fallthru
      _
    %1537 = vsyncpa [#allocation3], 1
    %1538 = vsyncpa [#allocation5], 1

</llo_original>
